<compile_context>
chip_gen: v6e
topology: v6e:2x2x1
jax: 0.10.0
libtpu: 0.0.40
codegen_flags: <defaults>
</compile_context>

<pallas_src>
import functools

import jax
import jax.numpy as jnp
from jax import lax
from jax.experimental import pallas as pl
from jax.experimental.pallas import tpu as pltpu


def _apply_act(x, name):
    if name == "sigmoid":
        return jax.nn.sigmoid(x)
    if name == "tanh":
        return jnp.tanh(x)
    if name is None:
        return x
    raise ValueError(f"unsupported activation: {name}")


def _lstm_gates(gates, H):
    """Split pre-activations (N, 4H) into activated (i, f, g, o), PyTorch order."""
    if 4 * H <= 128:
        # All four gates fit in one 128-lane vreg row: one full-width sigmoid
        # pass + one full-width tanh pass on the EUP, then cheap lane slices.
        sig = jax.nn.sigmoid(gates)
        th = jnp.tanh(gates)
        return (sig[:, 0 * H:1 * H], sig[:, 1 * H:2 * H],
                th[:, 2 * H:3 * H], sig[:, 3 * H:4 * H])
    # Large H: each gate is whole vregs already; activate per gate.
    i = jax.nn.sigmoid(gates[:, 0 * H:1 * H])
    f = jax.nn.sigmoid(gates[:, 1 * H:2 * H])
    g = jnp.tanh(gates[:, 2 * H:3 * H])
    o = jax.nn.sigmoid(gates[:, 3 * H:4 * H])
    return i, f, g, o


def _encoder_kernel(*refs, layer_dims, seq_len, batch, h_activ, out_activ,
                    compute_dtype):
    """Fused multi-layer LSTM encoder.

    refs = [x(L*N, D0),
            wih_0(D0,4H0), whh_0(H0,4H0), b_0(1,4H0), ... per layer ...,
            out(L*N, H_last),
            inter_buf_1..inter_buf_{nl-1},   # VMEM, (L*N, H_l) f32
            gates_buf_0..gates_buf_{nl-1}]   # VMEM, (L*N, 4H_l) f32
    """
    num_layers = len(layer_dims) - 1
    L, N = seq_len, batch

    x_ref = refs[0]
    w_refs = refs[1:1 + 3 * num_layers]
    out_ref = refs[1 + 3 * num_layers]
    scratch = refs[2 + 3 * num_layers:]
    inter_bufs = scratch[:num_layers - 1]
    gates_bufs = scratch[num_layers - 1:]

    src = x_ref
    for layer in range(num_layers):
        H = layer_dims[layer + 1]
        wih = w_refs[3 * layer]        # (D_in, 4H)  compute_dtype
        whh = w_refs[3 * layer + 1]    # (H,   4H)  compute_dtype
        b = w_refs[3 * layer + 2]      # (1,   4H)  f32 (b_ih + b_hh pre-folded)
        gates_buf = gates_bufs[layer]
        dst = out_ref if layer == num_layers - 1 else inter_bufs[layer]
        act = out_activ if layer == num_layers - 1 else h_activ

        # Input projection for ALL timesteps as one MXU matmul; bias add hoisted
        # out of the recurrence.  f32 accumulation regardless of operand dtype.
        x_all = src[...].astype(compute_dtype)                    # (L*N, D_in)
        gates_buf[...] = (
            jnp.dot(x_all, wih[...], preferred_element_type=jnp.float32)
            + b[...])

        whh_v = whh[...]  # hoist recurrent weight load out of the time loop

        def step(t, carry, *, _H=H, _whh=whh_v, _gates=gates_buf,
                 _dst=dst, _act=act):
            h, c = carry
            row = pl.ds(t * N, N)
            gates = _gates[row, :] + jnp.dot(
                h.astype(compute_dtype), _whh,
                preferred_element_type=jnp.float32)
            i_g, f_g, g_g, o_g = _lstm_gates(gates, _H)
            c_new = f_g * c + i_g * g_g
            h_new = o_g * jnp.tanh(c_new)
            # Activation applied only to the layer *output* (as the PyTorch
            # Encoder does outside the LSTM); the recurrent h stays unactivated.
            _dst[row, :] = _apply_act(h_new, _act).astype(_dst.dtype)
            return h_new, c_new

        carry0 = (jnp.zeros((N, H), jnp.float32),
                  jnp.zeros((N, H), jnp.float32))
        lax.fori_loop(0, L, step, carry0, unroll=(L <= 32))
        src = dst


def prepare_encoder_params(torch_layout_params):
    """One-time weight prep (pre-transpose, fold biases) from PyTorch layout."""
    prepped = []
    for p in torch_layout_params:
        prepped.append(dict(
            wih_t=jnp.asarray(p["w_ih"], jnp.float32).T,            # (D_in, 4H)
            whh_t=jnp.asarray(p["w_hh"], jnp.float32).T,            # (H,    4H)
            b=(jnp.asarray(p["b_ih"], jnp.float32)
               + jnp.asarray(p["b_hh"], jnp.float32)).reshape(1, -1),
        ))
    return prepped


def encoder_forward(x, params, *, h_activ="sigmoid", out_activ="tanh",
                    compute_dtype=jnp.float32):
    """Pallas version of Encoder.forward.  x: (L, N, D_in) -> squeeze((L, N, H_out))."""
    L, N, D0 = x.shape
    layer_dims = [D0] + [p["whh_t"].shape[0] for p in params]
    num_layers = len(params)
    H_out = layer_dims[-1]

    kernel = functools.partial(
        _encoder_kernel, layer_dims=tuple(layer_dims), seq_len=L, batch=N,
        h_activ=h_activ, out_activ=out_activ, compute_dtype=compute_dtype)

    scratch_shapes = (
        [pltpu.VMEM((L * N, layer_dims[l + 1]), jnp.float32)
         for l in range(num_layers - 1)]                      # inter-layer acts
        + [pltpu.VMEM((L * N, 4 * layer_dims[l + 1]), jnp.float32)
           for l in range(num_layers)]                        # per-layer gates
    )

    inputs = [x.reshape(L * N, D0).astype(compute_dtype)]
    for p in params:
        inputs += [p["wih_t"].astype(compute_dtype),
                   p["whh_t"].astype(compute_dtype),
                   p["b"]]

    out2d = pl.pallas_call(
        kernel,
        out_shape=jax.ShapeDtypeStruct((L * N, H_out), jnp.float32),
        scratch_shapes=scratch_shapes,
        compiler_params=pltpu.CompilerParams(
            vmem_limit_bytes=32 * 1024 * 1024),
    )(*inputs)

    # last layer: out_activ(x).squeeze()  (activation already applied in-kernel)
    return jnp.squeeze(out2d.reshape(L, N, H_out))


def init_encoder_params(key, input_dim, out_dim, h_dims):
    """Deterministic synthetic init mimicking PyTorch LSTM param shapes."""
    layer_dims = [input_dim] + list(h_dims) + [out_dim]
    params = []
    for idx in range(len(layer_dims) - 1):
        d_in, h = layer_dims[idx], layer_dims[idx + 1]
        key, k1, k2, k3, k4 = jax.random.split(key, 5)
        scale = 1.0 / jnp.sqrt(h)
        params.append(dict(
            w_ih=jax.random.uniform(k1, (4 * h, d_in), jnp.float32, -scale, scale),
            w_hh=jax.random.uniform(k2, (4 * h, h), jnp.float32, -scale, scale),
            b_ih=jax.random.uniform(k3, (4 * h,), jnp.float32, -scale, scale),
            b_hh=jax.random.uniform(k4, (4 * h,), jnp.float32, -scale, scale),
        ))
    return params


# ----------------------- pure-JAX reference (for sanity) -----------------------
def _ref_lstm_layer(x, p, activation):
    H = p["w_hh"].shape[1]
    wih_t, whh_t = p["w_ih"].T, p["w_hh"].T
    b = p["b_ih"] + p["b_hh"]

    def step(carry, x_t):
        h, c = carry
        gates = x_t @ wih_t + h @ whh_t + b
        i = jax.nn.sigmoid(gates[:, 0 * H:1 * H])
        f = jax.nn.sigmoid(gates[:, 1 * H:2 * H])
        g = jnp.tanh(gates[:, 2 * H:3 * H])
        o = jax.nn.sigmoid(gates[:, 3 * H:4 * H])
        c = f * c + i * g
        h = o * jnp.tanh(c)
        return (h, c), _apply_act(h, activation)

    N = x.shape[1]
    init = (jnp.zeros((N, H), jnp.float32), jnp.zeros((N, H), jnp.float32))
    _, ys = jax.lax.scan(step, init, x)
    return ys


def _ref_encoder(x, params, h_activ="sigmoid", out_activ="tanh"):
    n = len(params)
    for i, p in enumerate(params):
        x = _ref_lstm_layer(x, p, h_activ if i < n - 1 else out_activ)
    return jnp.squeeze(x)


if __name__ == "__main__":
    # Small shapes consistent with the module: seq=8, batch=2,
    # input_dim=16, h_dims=[32], out_dim=8  (layer_dims = [16, 32, 8]).
    L, N, D_IN = 8, 2, 16
    H_DIMS, D_OUT = [32], 8

    key = jax.random.PRNGKey(0)
    k_x, k_p = jax.random.split(key)
    x = jax.random.normal(k_x, (L, N, D_IN), jnp.float32)
    torch_params = init_encoder_params(k_p, D_IN, D_OUT, H_DIMS)
    params = prepare_encoder_params(torch_params)

    # f32 path: bit-faithful to the PyTorch/JAX reference.
    out = jax.block_until_ready(encoder_forward(x, params))
    ref = jax.block_until_ready(_ref_encoder(x, torch_params))
    assert out.shape == (L, N, D_OUT), out.shape
    assert jnp.allclose(out, ref, atol=1e-5, rtol=1e-5), "mismatch vs JAX reference"

    # bf16 MXU path (v6e/v7x throughput option): bf16 operands, f32 accumulation,
    # f32 gate/state math.  Loose tolerance check just to validate the path runs.
    out_bf16 = jax.block_until_ready(
        encoder_forward(x, params, compute_dtype=jnp.bfloat16))
    assert out_bf16.shape == (L, N, D_OUT)
    assert float(jnp.max(jnp.abs(out_bf16 - ref))) < 1e-1, "bf16 path deviates too far"

    print("KERNEL_OK")
</pallas_src>

<mosaic_0001>
module attributes {stable_mosaic.version = 11 : i64} {
  func.func @_encoder_kernel(%arg0: memref<16x16xf32, #tpu.memory_space<vmem>>, %arg1: memref<16x128xf32, #tpu.memory_space<vmem>>, %arg2: memref<32x128xf32, #tpu.memory_space<vmem>>, %arg3: memref<1x128xf32, #tpu.memory_space<vmem>>, %arg4: memref<32x32xf32, #tpu.memory_space<vmem>>, %arg5: memref<8x32xf32, #tpu.memory_space<vmem>>, %arg6: memref<1x32xf32, #tpu.memory_space<vmem>>, %arg7: memref<16x8xf32, #tpu.memory_space<vmem>>, %arg8: memref<16x32xf32, #tpu.memory_space<vmem>>, %arg9: memref<16x128xf32, #tpu.memory_space<vmem>>, %arg10: memref<16x32xf32, #tpu.memory_space<vmem>>) attributes {dimension_semantics = [], scalar_prefetch = 0 : i64, scratch_operands = 3 : i64, tpu.core_type = #tpu.core_type<tc>} {
    %c0 = arith.constant 0 : index
    %c0_0 = arith.constant 0 : index
    %0 = vector.load %arg0[%c0, %c0_0] : memref<16x16xf32, #tpu.memory_space<vmem>>, vector<16x16xf32>
    %c0_1 = arith.constant 0 : index
    %c0_2 = arith.constant 0 : index
    %1 = vector.load %arg1[%c0_1, %c0_2] : memref<16x128xf32, #tpu.memory_space<vmem>>, vector<16x128xf32>
    %cst = arith.constant dense<0.000000e+00> : vector<16x128xf32>
    %2 = tpu.matmul %0, %1, %cst {dimension_numbers = #tpu.dot_dimension_numbers<[1], [0], [0], [1], [0, 0, 1, 1], [], []>} : vector<16x16xf32>, vector<16x128xf32>, vector<16x128xf32> -> vector<16x128xf32>
    %c0_3 = arith.constant 0 : index
    %c0_4 = arith.constant 0 : index
    %3 = vector.load %arg3[%c0_3, %c0_4] : memref<1x128xf32, #tpu.memory_space<vmem>>, vector<1x128xf32>
    %4 = vector.broadcast %3 : vector<1x128xf32> to vector<16x128xf32>
    %5 = arith.addf %2, %4 : vector<16x128xf32>
    %c0_5 = arith.constant 0 : index
    %c0_6 = arith.constant 0 : index
    %6 = vector.load %arg9[%c0_5, %c0_6] : memref<16x128xf32, #tpu.memory_space<vmem>>, vector<16x128xf32>
    tpu.vector_store %arg9[%c0_5, %c0_6], %5 {strides = array<i32>} : memref<16x128xf32, #tpu.memory_space<vmem>>, vector<16x128xf32>,
    %c0_7 = arith.constant 0 : index
    %c0_8 = arith.constant 0 : index
    %7 = vector.load %arg2[%c0_7, %c0_8] : memref<32x128xf32, #tpu.memory_space<vmem>>, vector<32x128xf32>
    %cst_9 = arith.constant 0.000000e+00 : f32
    %8 = vector.broadcast %cst_9 : f32 to vector<2x32xf32>
    %cst_10 = arith.constant 0.000000e+00 : f32
    %9 = vector.broadcast %cst_10 : f32 to vector<2x32xf32>
    %c0_i32 = arith.constant 0 : i32
    %c2_i32 = arith.constant 2 : i32
    %10 = arith.muli %c0_i32, %c2_i32 : i32
    %11 = arith.index_cast %10 : i32 to index
    %c0_11 = arith.constant 0 : index
    %12 = vector.load %arg9[%11, %c0_11] : memref<16x128xf32, #tpu.memory_space<vmem>>, vector<2x128xf32>
    %cst_12 = arith.constant dense<0.000000e+00> : vector<2x128xf32>
    %13 = tpu.matmul %8, %7, %cst_12 {dimension_numbers = #tpu.dot_dimension_numbers<[1], [0], [0], [1], [0, 0, 1, 1], [], []>} : vector<2x32xf32>, vector<32x128xf32>, vector<2x128xf32> -> vector<2x128xf32>
    %14 = arith.addf %12, %13 : vector<2x128xf32>
    %15 = arith.negf %14 : vector<2x128xf32>
    %16 = math.exp %15 : vector<2x128xf32>
    %cst_13 = arith.constant 1.000000e+00 : f32
    %17 = vector.broadcast %cst_13 : f32 to vector<2x128xf32>
    %18 = arith.addf %17, %16 : vector<2x128xf32>
    %19 = arith.divf %17, %18 : vector<2x128xf32>
    %20 = math.tanh %14 : vector<2x128xf32>
    %21 = vector.extract_strided_slice %19 {offsets = [0, 0], sizes = [2, 32], strides = [1, 1]} : vector<2x128xf32> to vector<2x32xf32>
    %22 = vector.extract_strided_slice %19 {offsets = [0, 32], sizes = [2, 32], strides = [1, 1]} : vector<2x128xf32> to vector<2x32xf32>
    %23 = vector.extract_strided_slice %20 {offsets = [0, 64], sizes = [2, 32], strides = [1, 1]} : vector<2x128xf32> to vector<2x32xf32>
    %24 = vector.extract_strided_slice %19 {offsets = [0, 96], sizes = [2, 32], strides = [1, 1]} : vector<2x128xf32> to vector<2x32xf32>
    %25 = arith.mulf %22, %9 : vector<2x32xf32>
    %26 = arith.mulf %21, %23 : vector<2x32xf32>
    %27 = arith.addf %25, %26 : vector<2x32xf32>
    %28 = math.tanh %27 : vector<2x32xf32>
    %29 = arith.mulf %24, %28 : vector<2x32xf32>
    %30 = arith.negf %29 : vector<2x32xf32>
    %31 = math.exp %30 : vector<2x32xf32>
    %cst_14 = arith.constant 1.000000e+00 : f32
    %32 = vector.broadcast %cst_14 : f32 to vector<2x32xf32>
    %33 = arith.addf %32, %31 : vector<2x32xf32>
    %34 = arith.divf %32, %33 : vector<2x32xf32>
    %35 = arith.index_cast %10 : i32 to index
    %c0_15 = arith.constant 0 : index
    %36 = vector.load %arg8[%35, %c0_15] : memref<16x32xf32, #tpu.memory_space<vmem>>, vector<2x32xf32>
    tpu.vector_store %arg8[%35, %c0_15], %34 {strides = array<i32>} : memref<16x32xf32, #tpu.memory_space<vmem>>, vector<2x32xf32>,
    %c1_i32 = arith.constant 1 : i32
    %c2_i32_16 = arith.constant 2 : i32
    %37 = arith.muli %c1_i32, %c2_i32_16 : i32
    %38 = arith.index_cast %37 : i32 to index
    %c0_17 = arith.constant 0 : index
    %39 = vector.load %arg9[%38, %c0_17] : memref<16x128xf32, #tpu.memory_space<vmem>>, vector<2x128xf32>
    %cst_18 = arith.constant dense<0.000000e+00> : vector<2x128xf32>
    %40 = tpu.matmul %29, %7, %cst_18 {dimension_numbers = #tpu.dot_dimension_numbers<[1], [0], [0], [1], [0, 0, 1, 1], [], []>} : vector<2x32xf32>, vector<32x128xf32>, vector<2x128xf32> -> vector<2x128xf32>
    %41 = arith.addf %39, %40 : vector<2x128xf32>
    %42 = arith.negf %41 : vector<2x128xf32>
    %43 = math.exp %42 : vector<2x128xf32>
    %cst_19 = arith.constant 1.000000e+00 : f32
    %44 = vector.broadcast %cst_19 : f32 to vector<2x128xf32>
    %45 = arith.addf %44, %43 : vector<2x128xf32>
    %46 = arith.divf %44, %45 : vector<2x128xf32>
    %47 = math.tanh %41 : vector<2x128xf32>
    %48 = vector.extract_strided_slice %46 {offsets = [0, 0], sizes = [2, 32], strides = [1, 1]} : vector<2x128xf32> to vector<2x32xf32>
    %49 = vector.extract_strided_slice %46 {offsets = [0, 32], sizes = [2, 32], strides = [1, 1]} : vector<2x128xf32> to vector<2x32xf32>
    %50 = vector.extract_strided_slice %47 {offsets = [0, 64], sizes = [2, 32], strides = [1, 1]} : vector<2x128xf32> to vector<2x32xf32>
    %51 = vector.extract_strided_slice %46 {offsets = [0, 96], sizes = [2, 32], strides = [1, 1]} : vector<2x128xf32> to vector<2x32xf32>
    %52 = arith.mulf %49, %27 : vector<2x32xf32>
    %53 = arith.mulf %48, %50 : vector<2x32xf32>
    %54 = arith.addf %52, %53 : vector<2x32xf32>
    %55 = math.tanh %54 : vector<2x32xf32>
    %56 = arith.mulf %51, %55 : vector<2x32xf32>
    %57 = arith.negf %56 : vector<2x32xf32>
    %58 = math.exp %57 : vector<2x32xf32>
    %cst_20 = arith.constant 1.000000e+00 : f32
    %59 = vector.broadcast %cst_20 : f32 to vector<2x32xf32>
    %60 = arith.addf %59, %58 : vector<2x32xf32>
    %61 = arith.divf %59, %60 : vector<2x32xf32>
    %62 = arith.index_cast %37 : i32 to index
    %c0_21 = arith.constant 0 : index
    %63 = vector.load %arg8[%62, %c0_21] : memref<16x32xf32, #tpu.memory_space<vmem>>, vector<2x32xf32>
    tpu.vector_store %arg8[%62, %c0_21], %61 {strides = array<i32>} : memref<16x32xf32, #tpu.memory_space<vmem>>, vector<2x32xf32>,
    %c2_i32_22 = arith.constant 2 : i32
    %c2_i32_23 = arith.constant 2 : i32
    %64 = arith.muli %c2_i32_22, %c2_i32_23 : i32
    %65 = arith.index_cast %64 : i32 to index
    %c0_24 = arith.constant 0 : index
    %66 = vector.load %arg9[%65, %c0_24] : memref<16x128xf32, #tpu.memory_space<vmem>>, vector<2x128xf32>
    %cst_25 = arith.constant dense<0.000000e+00> : vector<2x128xf32>
    %67 = tpu.matmul %56, %7, %cst_25 {dimension_numbers = #tpu.dot_dimension_numbers<[1], [0], [0], [1], [0, 0, 1, 1], [], []>} : vector<2x32xf32>, vector<32x128xf32>, vector<2x128xf32> -> vector<2x128xf32>
    %68 = arith.addf %66, %67 : vector<2x128xf32>
    %69 = arith.negf %68 : vector<2x128xf32>
    %70 = math.exp %69 : vector<2x128xf32>
    %cst_26 = arith.constant 1.000000e+00 : f32
    %71 = vector.broadcast %cst_26 : f32 to vector<2x128xf32>
    %72 = arith.addf %71, %70 : vector<2x128xf32>
    %73 = arith.divf %71, %72 : vector<2x128xf32>
    %74 = math.tanh %68 : vector<2x128xf32>
    %75 = vector.extract_strided_slice %73 {offsets = [0, 0], sizes = [2, 32], strides = [1, 1]} : vector<2x128xf32> to vector<2x32xf32>
    %76 = vector.extract_strided_slice %73 {offsets = [0, 32], sizes = [2, 32], strides = [1, 1]} : vector<2x128xf32> to vector<2x32xf32>
    %77 = vector.extract_strided_slice %74 {offsets = [0, 64], sizes = [2, 32], strides = [1, 1]} : vector<2x128xf32> to vector<2x32xf32>
    %78 = vector.extract_strided_slice %73 {offsets = [0, 96], sizes = [2, 32], strides = [1, 1]} : vector<2x128xf32> to vector<2x32xf32>
    %79 = arith.mulf %76, %54 : vector<2x32xf32>
    %80 = arith.mulf %75, %77 : vector<2x32xf32>
    %81 = arith.addf %79, %80 : vector<2x32xf32>
    %82 = math.tanh %81 : vector<2x32xf32>
    %83 = arith.mulf %78, %82 : vector<2x32xf32>
    %84 = arith.negf %83 : vector<2x32xf32>
    %85 = math.exp %84 : vector<2x32xf32>
    %cst_27 = arith.constant 1.000000e+00 : f32
    %86 = vector.broadcast %cst_27 : f32 to vector<2x32xf32>
    %87 = arith.addf %86, %85 : vector<2x32xf32>
    %88 = arith.divf %86, %87 : vector<2x32xf32>
    %89 = arith.index_cast %64 : i32 to index
    %c0_28 = arith.constant 0 : index
    %90 = vector.load %arg8[%89, %c0_28] : memref<16x32xf32, #tpu.memory_space<vmem>>, vector<2x32xf32>
    tpu.vector_store %arg8[%89, %c0_28], %88 {strides = array<i32>} : memref<16x32xf32, #tpu.memory_space<vmem>>, vector<2x32xf32>,
    %c3_i32 = arith.constant 3 : i32
    %c2_i32_29 = arith.constant 2 : i32
    %91 = arith.muli %c3_i32, %c2_i32_29 : i32
    %92 = arith.index_cast %91 : i32 to index
    %c0_30 = arith.constant 0 : index
    %93 = vector.load %arg9[%92, %c0_30] : memref<16x128xf32, #tpu.memory_space<vmem>>, vector<2x128xf32>
    %cst_31 = arith.constant dense<0.000000e+00> : vector<2x128xf32>
    %94 = tpu.matmul %83, %7, %cst_31 {dimension_numbers = #tpu.dot_dimension_numbers<[1], [0], [0], [1], [0, 0, 1, 1], [], []>} : vector<2x32xf32>, vector<32x128xf32>, vector<2x128xf32> -> vector<2x128xf32>
    %95 = arith.addf %93, %94 : vector<2x128xf32>
    %96 = arith.negf %95 : vector<2x128xf32>
    %97 = math.exp %96 : vector<2x128xf32>
    %cst_32 = arith.constant 1.000000e+00 : f32
    %98 = vector.broadcast %cst_32 : f32 to vector<2x128xf32>
    %99 = arith.addf %98, %97 : vector<2x128xf32>
    %100 = arith.divf %98, %99 : vector<2x128xf32>
    %101 = math.tanh %95 : vector<2x128xf32>
    %102 = vector.extract_strided_slice %100 {offsets = [0, 0], sizes = [2, 32], strides = [1, 1]} : vector<2x128xf32> to vector<2x32xf32>
    %103 = vector.extract_strided_slice %100 {offsets = [0, 32], sizes = [2, 32], strides = [1, 1]} : vector<2x128xf32> to vector<2x32xf32>
    %104 = vector.extract_strided_slice %101 {offsets = [0, 64], sizes = [2, 32], strides = [1, 1]} : vector<2x128xf32> to vector<2x32xf32>
    %105 = vector.extract_strided_slice %100 {offsets = [0, 96], sizes = [2, 32], strides = [1, 1]} : vector<2x128xf32> to vector<2x32xf32>
    %106 = arith.mulf %103, %81 : vector<2x32xf32>
    %107 = arith.mulf %102, %104 : vector<2x32xf32>
    %108 = arith.addf %106, %107 : vector<2x32xf32>
    %109 = math.tanh %108 : vector<2x32xf32>
    %110 = arith.mulf %105, %109 : vector<2x32xf32>
    %111 = arith.negf %110 : vector<2x32xf32>
    %112 = math.exp %111 : vector<2x32xf32>
    %cst_33 = arith.constant 1.000000e+00 : f32
    %113 = vector.broadcast %cst_33 : f32 to vector<2x32xf32>
    %114 = arith.addf %113, %112 : vector<2x32xf32>
    %115 = arith.divf %113, %114 : vector<2x32xf32>
    %116 = arith.index_cast %91 : i32 to index
    %c0_34 = arith.constant 0 : index
    %117 = vector.load %arg8[%116, %c0_34] : memref<16x32xf32, #tpu.memory_space<vmem>>, vector<2x32xf32>
    tpu.vector_store %arg8[%116, %c0_34], %115 {strides = array<i32>} : memref<16x32xf32, #tpu.memory_space<vmem>>, vector<2x32xf32>,
    %c4_i32 = arith.constant 4 : i32
    %c2_i32_35 = arith.constant 2 : i32
    %118 = arith.muli %c4_i32, %c2_i32_35 : i32
    %119 = arith.index_cast %118 : i32 to index
    %c0_36 = arith.constant 0 : index
    %120 = vector.load %arg9[%119, %c0_36] : memref<16x128xf32, #tpu.memory_space<vmem>>, vector<2x128xf32>
    %cst_37 = arith.constant dense<0.000000e+00> : vector<2x128xf32>
    %121 = tpu.matmul %110, %7, %cst_37 {dimension_numbers = #tpu.dot_dimension_numbers<[1], [0], [0], [1], [0, 0, 1, 1], [], []>} : vector<2x32xf32>, vector<32x128xf32>, vector<2x128xf32> -> vector<2x128xf32>
    %122 = arith.addf %120, %121 : vector<2x128xf32>
    %123 = arith.negf %122 : vector<2x128xf32>
    %124 = math.exp %123 : vector<2x128xf32>
    %cst_38 = arith.constant 1.000000e+00 : f32
    %125 = vector.broadcast %cst_38 : f32 to vector<2x128xf32>
    %126 = arith.addf %125, %124 : vector<2x128xf32>
    %127 = arith.divf %125, %126 : vector<2x128xf32>
    %128 = math.tanh %122 : vector<2x128xf32>
    %129 = vector.extract_strided_slice %127 {offsets = [0, 0], sizes = [2, 32], strides = [1, 1]} : vector<2x128xf32> to vector<2x32xf32>
    %130 = vector.extract_strided_slice %127 {offsets = [0, 32], sizes = [2, 32], strides = [1, 1]} : vector<2x128xf32> to vector<2x32xf32>
    %131 = vector.extract_strided_slice %128 {offsets = [0, 64], sizes = [2, 32], strides = [1, 1]} : vector<2x128xf32> to vector<2x32xf32>
    %132 = vector.extract_strided_slice %127 {offsets = [0, 96], sizes = [2, 32], strides = [1, 1]} : vector<2x128xf32> to vector<2x32xf32>
    %133 = arith.mulf %130, %108 : vector<2x32xf32>
    %134 = arith.mulf %129, %131 : vector<2x32xf32>
    %135 = arith.addf %133, %134 : vector<2x32xf32>
    %136 = math.tanh %135 : vector<2x32xf32>
    %137 = arith.mulf %132, %136 : vector<2x32xf32>
    %138 = arith.negf %137 : vector<2x32xf32>
    %139 = math.exp %138 : vector<2x32xf32>
    %cst_39 = arith.constant 1.000000e+00 : f32
    %140 = vector.broadcast %cst_39 : f32 to vector<2x32xf32>
    %141 = arith.addf %140, %139 : vector<2x32xf32>
    %142 = arith.divf %140, %141 : vector<2x32xf32>
    %143 = arith.index_cast %118 : i32 to index
    %c0_40 = arith.constant 0 : index
    %144 = vector.load %arg8[%143, %c0_40] : memref<16x32xf32, #tpu.memory_space<vmem>>, vector<2x32xf32>
    tpu.vector_store %arg8[%143, %c0_40], %142 {strides = array<i32>} : memref<16x32xf32, #tpu.memory_space<vmem>>, vector<2x32xf32>,
    %c5_i32 = arith.constant 5 : i32
    %c2_i32_41 = arith.constant 2 : i32
    %145 = arith.muli %c5_i32, %c2_i32_41 : i32
    %146 = arith.index_cast %145 : i32 to index
    %c0_42 = arith.constant 0 : index
    %147 = vector.load %arg9[%146, %c0_42] : memref<16x128xf32, #tpu.memory_space<vmem>>, vector<2x128xf32>
    %cst_43 = arith.constant dense<0.000000e+00> : vector<2x128xf32>
    %148 = tpu.matmul %137, %7, %cst_43 {dimension_numbers = #tpu.dot_dimension_numbers<[1], [0], [0], [1], [0, 0, 1, 1], [], []>} : vector<2x32xf32>, vector<32x128xf32>, vector<2x128xf32> -> vector<2x128xf32>
    %149 = arith.addf %147, %148 : vector<2x128xf32>
    %150 = arith.negf %149 : vector<2x128xf32>
    %151 = math.exp %150 : vector<2x128xf32>
    %cst_44 = arith.constant 1.000000e+00 : f32
    %152 = vector.broadcast %cst_44 : f32 to vector<2x128xf32>
    %153 = arith.addf %152, %151 : vector<2x128xf32>
    %154 = arith.divf %152, %153 : vector<2x128xf32>
    %155 = math.tanh %149 : vector<2x128xf32>
    %156 = vector.extract_strided_slice %154 {offsets = [0, 0], sizes = [2, 32], strides = [1, 1]} : vector<2x128xf32> to vector<2x32xf32>
    %157 = vector.extract_strided_slice %154 {offsets = [0, 32], sizes = [2, 32], strides = [1, 1]} : vector<2x128xf32> to vector<2x32xf32>
    %158 = vector.extract_strided_slice %155 {offsets = [0, 64], sizes = [2, 32], strides = [1, 1]} : vector<2x128xf32> to vector<2x32xf32>
    %159 = vector.extract_strided_slice %154 {offsets = [0, 96], sizes = [2, 32], strides = [1, 1]} : vector<2x128xf32> to vector<2x32xf32>
    %160 = arith.mulf %157, %135 : vector<2x32xf32>
    %161 = arith.mulf %156, %158 : vector<2x32xf32>
    %162 = arith.addf %160, %161 : vector<2x32xf32>
    %163 = math.tanh %162 : vector<2x32xf32>
    %164 = arith.mulf %159, %163 : vector<2x32xf32>
    %165 = arith.negf %164 : vector<2x32xf32>
    %166 = math.exp %165 : vector<2x32xf32>
    %cst_45 = arith.constant 1.000000e+00 : f32
    %167 = vector.broadcast %cst_45 : f32 to vector<2x32xf32>
    %168 = arith.addf %167, %166 : vector<2x32xf32>
    %169 = arith.divf %167, %168 : vector<2x32xf32>
    %170 = arith.index_cast %145 : i32 to index
    %c0_46 = arith.constant 0 : index
    %171 = vector.load %arg8[%170, %c0_46] : memref<16x32xf32, #tpu.memory_space<vmem>>, vector<2x32xf32>
    tpu.vector_store %arg8[%170, %c0_46], %169 {strides = array<i32>} : memref<16x32xf32, #tpu.memory_space<vmem>>, vector<2x32xf32>,
    %c6_i32 = arith.constant 6 : i32
    %c2_i32_47 = arith.constant 2 : i32
    %172 = arith.muli %c6_i32, %c2_i32_47 : i32
    %173 = arith.index_cast %172 : i32 to index
    %c0_48 = arith.constant 0 : index
    %174 = vector.load %arg9[%173, %c0_48] : memref<16x128xf32, #tpu.memory_space<vmem>>, vector<2x128xf32>
    %cst_49 = arith.constant dense<0.000000e+00> : vector<2x128xf32>
    %175 = tpu.matmul %164, %7, %cst_49 {dimension_numbers = #tpu.dot_dimension_numbers<[1], [0], [0], [1], [0, 0, 1, 1], [], []>} : vector<2x32xf32>, vector<32x128xf32>, vector<2x128xf32> -> vector<2x128xf32>
    %176 = arith.addf %174, %175 : vector<2x128xf32>
    %177 = arith.negf %176 : vector<2x128xf32>
    %178 = math.exp %177 : vector<2x128xf32>
    %cst_50 = arith.constant 1.000000e+00 : f32
    %179 = vector.broadcast %cst_50 : f32 to vector<2x128xf32>
    %180 = arith.addf %179, %178 : vector<2x128xf32>
    %181 = arith.divf %179, %180 : vector<2x128xf32>
    %182 = math.tanh %176 : vector<2x128xf32>
    %183 = vector.extract_strided_slice %181 {offsets = [0, 0], sizes = [2, 32], strides = [1, 1]} : vector<2x128xf32> to vector<2x32xf32>
    %184 = vector.extract_strided_slice %181 {offsets = [0, 32], sizes = [2, 32], strides = [1, 1]} : vector<2x128xf32> to vector<2x32xf32>
    %185 = vector.extract_strided_slice %182 {offsets = [0, 64], sizes = [2, 32], strides = [1, 1]} : vector<2x128xf32> to vector<2x32xf32>
    %186 = vector.extract_strided_slice %181 {offsets = [0, 96], sizes = [2, 32], strides = [1, 1]} : vector<2x128xf32> to vector<2x32xf32>
    %187 = arith.mulf %184, %162 : vector<2x32xf32>
    %188 = arith.mulf %183, %185 : vector<2x32xf32>
    %189 = arith.addf %187, %188 : vector<2x32xf32>
    %190 = math.tanh %189 : vector<2x32xf32>
    %191 = arith.mulf %186, %190 : vector<2x32xf32>
    %192 = arith.negf %191 : vector<2x32xf32>
    %193 = math.exp %192 : vector<2x32xf32>
    %cst_51 = arith.constant 1.000000e+00 : f32
    %194 = vector.broadcast %cst_51 : f32 to vector<2x32xf32>
    %195 = arith.addf %194, %193 : vector<2x32xf32>
    %196 = arith.divf %194, %195 : vector<2x32xf32>
    %197 = arith.index_cast %172 : i32 to index
    %c0_52 = arith.constant 0 : index
    %198 = vector.load %arg8[%197, %c0_52] : memref<16x32xf32, #tpu.memory_space<vmem>>, vector<2x32xf32>
    tpu.vector_store %arg8[%197, %c0_52], %196 {strides = array<i32>} : memref<16x32xf32, #tpu.memory_space<vmem>>, vector<2x32xf32>,
    %c7_i32 = arith.constant 7 : i32
    %c2_i32_53 = arith.constant 2 : i32
    %199 = arith.muli %c7_i32, %c2_i32_53 : i32
    %200 = arith.index_cast %199 : i32 to index
    %c0_54 = arith.constant 0 : index
    %201 = vector.load %arg9[%200, %c0_54] : memref<16x128xf32, #tpu.memory_space<vmem>>, vector<2x128xf32>
    %cst_55 = arith.constant dense<0.000000e+00> : vector<2x128xf32>
    %202 = tpu.matmul %191, %7, %cst_55 {dimension_numbers = #tpu.dot_dimension_numbers<[1], [0], [0], [1], [0, 0, 1, 1], [], []>} : vector<2x32xf32>, vector<32x128xf32>, vector<2x128xf32> -> vector<2x128xf32>
    %203 = arith.addf %201, %202 : vector<2x128xf32>
    %204 = arith.negf %203 : vector<2x128xf32>
    %205 = math.exp %204 : vector<2x128xf32>
    %cst_56 = arith.constant 1.000000e+00 : f32
    %206 = vector.broadcast %cst_56 : f32 to vector<2x128xf32>
    %207 = arith.addf %206, %205 : vector<2x128xf32>
    %208 = arith.divf %206, %207 : vector<2x128xf32>
    %209 = math.tanh %203 : vector<2x128xf32>
    %210 = vector.extract_strided_slice %208 {offsets = [0, 0], sizes = [2, 32], strides = [1, 1]} : vector<2x128xf32> to vector<2x32xf32>
    %211 = vector.extract_strided_slice %208 {offsets = [0, 32], sizes = [2, 32], strides = [1, 1]} : vector<2x128xf32> to vector<2x32xf32>
    %212 = vector.extract_strided_slice %209 {offsets = [0, 64], sizes = [2, 32], strides = [1, 1]} : vector<2x128xf32> to vector<2x32xf32>
    %213 = vector.extract_strided_slice %208 {offsets = [0, 96], sizes = [2, 32], strides = [1, 1]} : vector<2x128xf32> to vector<2x32xf32>
    %214 = arith.mulf %211, %189 : vector<2x32xf32>
    %215 = arith.mulf %210, %212 : vector<2x32xf32>
    %216 = arith.addf %214, %215 : vector<2x32xf32>
    %217 = math.tanh %216 : vector<2x32xf32>
    %218 = arith.mulf %213, %217 : vector<2x32xf32>
    %219 = arith.negf %218 : vector<2x32xf32>
    %220 = math.exp %219 : vector<2x32xf32>
    %cst_57 = arith.constant 1.000000e+00 : f32
    %221 = vector.broadcast %cst_57 : f32 to vector<2x32xf32>
    %222 = arith.addf %221, %220 : vector<2x32xf32>
    %223 = arith.divf %221, %222 : vector<2x32xf32>
    %224 = arith.index_cast %199 : i32 to index
    %c0_58 = arith.constant 0 : index
    %225 = vector.load %arg8[%224, %c0_58] : memref<16x32xf32, #tpu.memory_space<vmem>>, vector<2x32xf32>
    tpu.vector_store %arg8[%224, %c0_58], %223 {strides = array<i32>} : memref<16x32xf32, #tpu.memory_space<vmem>>, vector<2x32xf32>,
    %c8_i32 = arith.constant 8 : i32
    %c0_59 = arith.constant 0 : index
    %c0_60 = arith.constant 0 : index
    %226 = vector.load %arg8[%c0_59, %c0_60] : memref<16x32xf32, #tpu.memory_space<vmem>>, vector<16x32xf32>
    %c0_61 = arith.constant 0 : index
    %c0_62 = arith.constant 0 : index
    %227 = vector.load %arg4[%c0_61, %c0_62] : memref<32x32xf32, #tpu.memory_space<vmem>>, vector<32x32xf32>
    %cst_63 = arith.constant dense<0.000000e+00> : vector<16x32xf32>
    %228 = tpu.matmul %226, %227, %cst_63 {dimension_numbers = #tpu.dot_dimension_numbers<[1], [0], [0], [1], [0, 0, 1, 1], [], []>} : vector<16x32xf32>, vector<32x32xf32>, vector<16x32xf32> -> vector<16x32xf32>
    %c0_64 = arith.constant 0 : index
    %c0_65 = arith.constant 0 : index
    %229 = vector.load %arg6[%c0_64, %c0_65] : memref<1x32xf32, #tpu.memory_space<vmem>>, vector<1x32xf32>
    %230 = vector.broadcast %229 : vector<1x32xf32> to vector<16x32xf32>
    %231 = arith.addf %228, %230 : vector<16x32xf32>
    %c0_66 = arith.constant 0 : index
    %c0_67 = arith.constant 0 : index
    %232 = vector.load %arg10[%c0_66, %c0_67] : memref<16x32xf32, #tpu.memory_space<vmem>>, vector<16x32xf32>
    tpu.vector_store %arg10[%c0_66, %c0_67], %231 {strides = array<i32>} : memref<16x32xf32, #tpu.memory_space<vmem>>, vector<16x32xf32>,
    %c0_68 = arith.constant 0 : index
    %c0_69 = arith.constant 0 : index
    %233 = vector.load %arg5[%c0_68, %c0_69] : memref<8x32xf32, #tpu.memory_space<vmem>>, vector<8x32xf32>
    %cst_70 = arith.constant 0.000000e+00 : f32
    %234 = vector.broadcast %cst_70 : f32 to vector<2x8xf32>
    %cst_71 = arith.constant 0.000000e+00 : f32
    %235 = vector.broadcast %cst_71 : f32 to vector<2x8xf32>
    %c0_i32_72 = arith.constant 0 : i32
    %c2_i32_73 = arith.constant 2 : i32
    %236 = arith.muli %c0_i32_72, %c2_i32_73 : i32
    %237 = arith.index_cast %236 : i32 to index
    %c0_74 = arith.constant 0 : index
    %238 = vector.load %arg10[%237, %c0_74] : memref<16x32xf32, #tpu.memory_space<vmem>>, vector<2x32xf32>
    %cst_75 = arith.constant dense<0.000000e+00> : vector<2x32xf32>
    %239 = tpu.matmul %234, %233, %cst_75 {dimension_numbers = #tpu.dot_dimension_numbers<[1], [0], [0], [1], [0, 0, 1, 1], [], []>} : vector<2x8xf32>, vector<8x32xf32>, vector<2x32xf32> -> vector<2x32xf32>
    %240 = arith.addf %238, %239 : vector<2x32xf32>
    %241 = arith.negf %240 : vector<2x32xf32>
    %242 = math.exp %241 : vector<2x32xf32>
    %cst_76 = arith.constant 1.000000e+00 : f32
    %243 = vector.broadcast %cst_76 : f32 to vector<2x32xf32>
    %244 = arith.addf %243, %242 : vector<2x32xf32>
    %245 = arith.divf %243, %244 : vector<2x32xf32>
    %246 = math.tanh %240 : vector<2x32xf32>
    %247 = vector.extract_strided_slice %245 {offsets = [0, 0], sizes = [2, 8], strides = [1, 1]} : vector<2x32xf32> to vector<2x8xf32>
    %248 = vector.extract_strided_slice %245 {offsets = [0, 8], sizes = [2, 8], strides = [1, 1]} : vector<2x32xf32> to vector<2x8xf32>
    %249 = vector.extract_strided_slice %246 {offsets = [0, 16], sizes = [2, 8], strides = [1, 1]} : vector<2x32xf32> to vector<2x8xf32>
    %250 = vector.extract_strided_slice %245 {offsets = [0, 24], sizes = [2, 8], strides = [1, 1]} : vector<2x32xf32> to vector<2x8xf32>
    %251 = arith.mulf %248, %235 : vector<2x8xf32>
    %252 = arith.mulf %247, %249 : vector<2x8xf32>
    %253 = arith.addf %251, %252 : vector<2x8xf32>
    %254 = math.tanh %253 : vector<2x8xf32>
    %255 = arith.mulf %250, %254 : vector<2x8xf32>
    %256 = math.tanh %255 : vector<2x8xf32>
    %257 = arith.index_cast %236 : i32 to index
    %c0_77 = arith.constant 0 : index
    %258 = vector.load %arg7[%257, %c0_77] : memref<16x8xf32, #tpu.memory_space<vmem>>, vector<2x8xf32>
    tpu.vector_store %arg7[%257, %c0_77], %256 {strides = array<i32>} : memref<16x8xf32, #tpu.memory_space<vmem>>, vector<2x8xf32>,
    %c1_i32_78 = arith.constant 1 : i32
    %c2_i32_79 = arith.constant 2 : i32
    %259 = arith.muli %c1_i32_78, %c2_i32_79 : i32
    %260 = arith.index_cast %259 : i32 to index
    %c0_80 = arith.constant 0 : index
    %261 = vector.load %arg10[%260, %c0_80] : memref<16x32xf32, #tpu.memory_space<vmem>>, vector<2x32xf32>
    %cst_81 = arith.constant dense<0.000000e+00> : vector<2x32xf32>
    %262 = tpu.matmul %255, %233, %cst_81 {dimension_numbers = #tpu.dot_dimension_numbers<[1], [0], [0], [1], [0, 0, 1, 1], [], []>} : vector<2x8xf32>, vector<8x32xf32>, vector<2x32xf32> -> vector<2x32xf32>
    %263 = arith.addf %261, %262 : vector<2x32xf32>
    %264 = arith.negf %263 : vector<2x32xf32>
    %265 = math.exp %264 : vector<2x32xf32>
    %cst_82 = arith.constant 1.000000e+00 : f32
    %266 = vector.broadcast %cst_82 : f32 to vector<2x32xf32>
    %267 = arith.addf %266, %265 : vector<2x32xf32>
    %268 = arith.divf %266, %267 : vector<2x32xf32>
    %269 = math.tanh %263 : vector<2x32xf32>
    %270 = vector.extract_strided_slice %268 {offsets = [0, 0], sizes = [2, 8], strides = [1, 1]} : vector<2x32xf32> to vector<2x8xf32>
    %271 = vector.extract_strided_slice %268 {offsets = [0, 8], sizes = [2, 8], strides = [1, 1]} : vector<2x32xf32> to vector<2x8xf32>
    %272 = vector.extract_strided_slice %269 {offsets = [0, 16], sizes = [2, 8], strides = [1, 1]} : vector<2x32xf32> to vector<2x8xf32>
    %273 = vector.extract_strided_slice %268 {offsets = [0, 24], sizes = [2, 8], strides = [1, 1]} : vector<2x32xf32> to vector<2x8xf32>
    %274 = arith.mulf %271, %253 : vector<2x8xf32>
    %275 = arith.mulf %270, %272 : vector<2x8xf32>
    %276 = arith.addf %274, %275 : vector<2x8xf32>
    %277 = math.tanh %276 : vector<2x8xf32>
    %278 = arith.mulf %273, %277 : vector<2x8xf32>
    %279 = math.tanh %278 : vector<2x8xf32>
    %280 = arith.index_cast %259 : i32 to index
    %c0_83 = arith.constant 0 : index
    %281 = vector.load %arg7[%280, %c0_83] : memref<16x8xf32, #tpu.memory_space<vmem>>, vector<2x8xf32>
    tpu.vector_store %arg7[%280, %c0_83], %279 {strides = array<i32>} : memref<16x8xf32, #tpu.memory_space<vmem>>, vector<2x8xf32>,
    %c2_i32_84 = arith.constant 2 : i32
    %c2_i32_85 = arith.constant 2 : i32
    %282 = arith.muli %c2_i32_84, %c2_i32_85 : i32
    %283 = arith.index_cast %282 : i32 to index
    %c0_86 = arith.constant 0 : index
    %284 = vector.load %arg10[%283, %c0_86] : memref<16x32xf32, #tpu.memory_space<vmem>>, vector<2x32xf32>
    %cst_87 = arith.constant dense<0.000000e+00> : vector<2x32xf32>
    %285 = tpu.matmul %278, %233, %cst_87 {dimension_numbers = #tpu.dot_dimension_numbers<[1], [0], [0], [1], [0, 0, 1, 1], [], []>} : vector<2x8xf32>, vector<8x32xf32>, vector<2x32xf32> -> vector<2x32xf32>
    %286 = arith.addf %284, %285 : vector<2x32xf32>
    %287 = arith.negf %286 : vector<2x32xf32>
    %288 = math.exp %287 : vector<2x32xf32>
    %cst_88 = arith.constant 1.000000e+00 : f32
    %289 = vector.broadcast %cst_88 : f32 to vector<2x32xf32>
    %290 = arith.addf %289, %288 : vector<2x32xf32>
    %291 = arith.divf %289, %290 : vector<2x32xf32>
    %292 = math.tanh %286 : vector<2x32xf32>
    %293 = vector.extract_strided_slice %291 {offsets = [0, 0], sizes = [2, 8], strides = [1, 1]} : vector<2x32xf32> to vector<2x8xf32>
    %294 = vector.extract_strided_slice %291 {offsets = [0, 8], sizes = [2, 8], strides = [1, 1]} : vector<2x32xf32> to vector<2x8xf32>
    %295 = vector.extract_strided_slice %292 {offsets = [0, 16], sizes = [2, 8], strides = [1, 1]} : vector<2x32xf32> to vector<2x8xf32>
    %296 = vector.extract_strided_slice %291 {offsets = [0, 24], sizes = [2, 8], strides = [1, 1]} : vector<2x32xf32> to vector<2x8xf32>
    %297 = arith.mulf %294, %276 : vector<2x8xf32>
    %298 = arith.mulf %293, %295 : vector<2x8xf32>
    %299 = arith.addf %297, %298 : vector<2x8xf32>
    %300 = math.tanh %299 : vector<2x8xf32>
    %301 = arith.mulf %296, %300 : vector<2x8xf32>
    %302 = math.tanh %301 : vector<2x8xf32>
    %303 = arith.index_cast %282 : i32 to index
    %c0_89 = arith.constant 0 : index
    %304 = vector.load %arg7[%303, %c0_89] : memref<16x8xf32, #tpu.memory_space<vmem>>, vector<2x8xf32>
    tpu.vector_store %arg7[%303, %c0_89], %302 {strides = array<i32>} : memref<16x8xf32, #tpu.memory_space<vmem>>, vector<2x8xf32>,
    %c3_i32_90 = arith.constant 3 : i32
    %c2_i32_91 = arith.constant 2 : i32
    %305 = arith.muli %c3_i32_90, %c2_i32_91 : i32
    %306 = arith.index_cast %305 : i32 to index
    %c0_92 = arith.constant 0 : index
    %307 = vector.load %arg10[%306, %c0_92] : memref<16x32xf32, #tpu.memory_space<vmem>>, vector<2x32xf32>
    %cst_93 = arith.constant dense<0.000000e+00> : vector<2x32xf32>
    %308 = tpu.matmul %301, %233, %cst_93 {dimension_numbers = #tpu.dot_dimension_numbers<[1], [0], [0], [1], [0, 0, 1, 1], [], []>} : vector<2x8xf32>, vector<8x32xf32>, vector<2x32xf32> -> vector<2x32xf32>
    %309 = arith.addf %307, %308 : vector<2x32xf32>
    %310 = arith.negf %309 : vector<2x32xf32>
    %311 = math.exp %310 : vector<2x32xf32>
    %cst_94 = arith.constant 1.000000e+00 : f32
    %312 = vector.broadcast %cst_94 : f32 to vector<2x32xf32>
    %313 = arith.addf %312, %311 : vector<2x32xf32>
    %314 = arith.divf %312, %313 : vector<2x32xf32>
    %315 = math.tanh %309 : vector<2x32xf32>
    %316 = vector.extract_strided_slice %314 {offsets = [0, 0], sizes = [2, 8], strides = [1, 1]} : vector<2x32xf32> to vector<2x8xf32>
    %317 = vector.extract_strided_slice %314 {offsets = [0, 8], sizes = [2, 8], strides = [1, 1]} : vector<2x32xf32> to vector<2x8xf32>
    %318 = vector.extract_strided_slice %315 {offsets = [0, 16], sizes = [2, 8], strides = [1, 1]} : vector<2x32xf32> to vector<2x8xf32>
    %319 = vector.extract_strided_slice %314 {offsets = [0, 24], sizes = [2, 8], strides = [1, 1]} : vector<2x32xf32> to vector<2x8xf32>
    %320 = arith.mulf %317, %299 : vector<2x8xf32>
    %321 = arith.mulf %316, %318 : vector<2x8xf32>
    %322 = arith.addf %320, %321 : vector<2x8xf32>
    %323 = math.tanh %322 : vector<2x8xf32>
    %324 = arith.mulf %319, %323 : vector<2x8xf32>
    %325 = math.tanh %324 : vector<2x8xf32>
    %326 = arith.index_cast %305 : i32 to index
    %c0_95 = arith.constant 0 : index
    %327 = vector.load %arg7[%326, %c0_95] : memref<16x8xf32, #tpu.memory_space<vmem>>, vector<2x8xf32>
    tpu.vector_store %arg7[%326, %c0_95], %325 {strides = array<i32>} : memref<16x8xf32, #tpu.memory_space<vmem>>, vector<2x8xf32>,
    %c4_i32_96 = arith.constant 4 : i32
    %c2_i32_97 = arith.constant 2 : i32
    %328 = arith.muli %c4_i32_96, %c2_i32_97 : i32
    %329 = arith.index_cast %328 : i32 to index
    %c0_98 = arith.constant 0 : index
    %330 = vector.load %arg10[%329, %c0_98] : memref<16x32xf32, #tpu.memory_space<vmem>>, vector<2x32xf32>
    %cst_99 = arith.constant dense<0.000000e+00> : vector<2x32xf32>
    %331 = tpu.matmul %324, %233, %cst_99 {dimension_numbers = #tpu.dot_dimension_numbers<[1], [0], [0], [1], [0, 0, 1, 1], [], []>} : vector<2x8xf32>, vector<8x32xf32>, vector<2x32xf32> -> vector<2x32xf32>
    %332 = arith.addf %330, %331 : vector<2x32xf32>
    %333 = arith.negf %332 : vector<2x32xf32>
    %334 = math.exp %333 : vector<2x32xf32>
    %cst_100 = arith.constant 1.000000e+00 : f32
    %335 = vector.broadcast %cst_100 : f32 to vector<2x32xf32>
    %336 = arith.addf %335, %334 : vector<2x32xf32>
    %337 = arith.divf %335, %336 : vector<2x32xf32>
    %338 = math.tanh %332 : vector<2x32xf32>
    %339 = vector.extract_strided_slice %337 {offsets = [0, 0], sizes = [2, 8], strides = [1, 1]} : vector<2x32xf32> to vector<2x8xf32>
    %340 = vector.extract_strided_slice %337 {offsets = [0, 8], sizes = [2, 8], strides = [1, 1]} : vector<2x32xf32> to vector<2x8xf32>
    %341 = vector.extract_strided_slice %338 {offsets = [0, 16], sizes = [2, 8], strides = [1, 1]} : vector<2x32xf32> to vector<2x8xf32>
    %342 = vector.extract_strided_slice %337 {offsets = [0, 24], sizes = [2, 8], strides = [1, 1]} : vector<2x32xf32> to vector<2x8xf32>
    %343 = arith.mulf %340, %322 : vector<2x8xf32>
    %344 = arith.mulf %339, %341 : vector<2x8xf32>
    %345 = arith.addf %343, %344 : vector<2x8xf32>
    %346 = math.tanh %345 : vector<2x8xf32>
    %347 = arith.mulf %342, %346 : vector<2x8xf32>
    %348 = math.tanh %347 : vector<2x8xf32>
    %349 = arith.index_cast %328 : i32 to index
    %c0_101 = arith.constant 0 : index
    %350 = vector.load %arg7[%349, %c0_101] : memref<16x8xf32, #tpu.memory_space<vmem>>, vector<2x8xf32>
    tpu.vector_store %arg7[%349, %c0_101], %348 {strides = array<i32>} : memref<16x8xf32, #tpu.memory_space<vmem>>, vector<2x8xf32>,
    %c5_i32_102 = arith.constant 5 : i32
    %c2_i32_103 = arith.constant 2 : i32
    %351 = arith.muli %c5_i32_102, %c2_i32_103 : i32
    %352 = arith.index_cast %351 : i32 to index
    %c0_104 = arith.constant 0 : index
    %353 = vector.load %arg10[%352, %c0_104] : memref<16x32xf32, #tpu.memory_space<vmem>>, vector<2x32xf32>
    %cst_105 = arith.constant dense<0.000000e+00> : vector<2x32xf32>
    %354 = tpu.matmul %347, %233, %cst_105 {dimension_numbers = #tpu.dot_dimension_numbers<[1], [0], [0], [1], [0, 0, 1, 1], [], []>} : vector<2x8xf32>, vector<8x32xf32>, vector<2x32xf32> -> vector<2x32xf32>
    %355 = arith.addf %353, %354 : vector<2x32xf32>
    %356 = arith.negf %355 : vector<2x32xf32>
    %357 = math.exp %356 : vector<2x32xf32>
    %cst_106 = arith.constant 1.000000e+00 : f32
    %358 = vector.broadcast %cst_106 : f32 to vector<2x32xf32>
    %359 = arith.addf %358, %357 : vector<2x32xf32>
    %360 = arith.divf %358, %359 : vector<2x32xf32>
    %361 = math.tanh %355 : vector<2x32xf32>
    %362 = vector.extract_strided_slice %360 {offsets = [0, 0], sizes = [2, 8], strides = [1, 1]} : vector<2x32xf32> to vector<2x8xf32>
    %363 = vector.extract_strided_slice %360 {offsets = [0, 8], sizes = [2, 8], strides = [1, 1]} : vector<2x32xf32> to vector<2x8xf32>
    %364 = vector.extract_strided_slice %361 {offsets = [0, 16], sizes = [2, 8], strides = [1, 1]} : vector<2x32xf32> to vector<2x8xf32>
    %365 = vector.extract_strided_slice %360 {offsets = [0, 24], sizes = [2, 8], strides = [1, 1]} : vector<2x32xf32> to vector<2x8xf32>
    %366 = arith.mulf %363, %345 : vector<2x8xf32>
    %367 = arith.mulf %362, %364 : vector<2x8xf32>
    %368 = arith.addf %366, %367 : vector<2x8xf32>
    %369 = math.tanh %368 : vector<2x8xf32>
    %370 = arith.mulf %365, %369 : vector<2x8xf32>
    %371 = math.tanh %370 : vector<2x8xf32>
    %372 = arith.index_cast %351 : i32 to index
    %c0_107 = arith.constant 0 : index
    %373 = vector.load %arg7[%372, %c0_107] : memref<16x8xf32, #tpu.memory_space<vmem>>, vector<2x8xf32>
    tpu.vector_store %arg7[%372, %c0_107], %371 {strides = array<i32>} : memref<16x8xf32, #tpu.memory_space<vmem>>, vector<2x8xf32>,
    %c6_i32_108 = arith.constant 6 : i32
    %c2_i32_109 = arith.constant 2 : i32
    %374 = arith.muli %c6_i32_108, %c2_i32_109 : i32
    %375 = arith.index_cast %374 : i32 to index
    %c0_110 = arith.constant 0 : index
    %376 = vector.load %arg10[%375, %c0_110] : memref<16x32xf32, #tpu.memory_space<vmem>>, vector<2x32xf32>
    %cst_111 = arith.constant dense<0.000000e+00> : vector<2x32xf32>
    %377 = tpu.matmul %370, %233, %cst_111 {dimension_numbers = #tpu.dot_dimension_numbers<[1], [0], [0], [1], [0, 0, 1, 1], [], []>} : vector<2x8xf32>, vector<8x32xf32>, vector<2x32xf32> -> vector<2x32xf32>
    %378 = arith.addf %376, %377 : vector<2x32xf32>
    %379 = arith.negf %378 : vector<2x32xf32>
    %380 = math.exp %379 : vector<2x32xf32>
    %cst_112 = arith.constant 1.000000e+00 : f32
    %381 = vector.broadcast %cst_112 : f32 to vector<2x32xf32>
    %382 = arith.addf %381, %380 : vector<2x32xf32>
    %383 = arith.divf %381, %382 : vector<2x32xf32>
    %384 = math.tanh %378 : vector<2x32xf32>
    %385 = vector.extract_strided_slice %383 {offsets = [0, 0], sizes = [2, 8], strides = [1, 1]} : vector<2x32xf32> to vector<2x8xf32>
    %386 = vector.extract_strided_slice %383 {offsets = [0, 8], sizes = [2, 8], strides = [1, 1]} : vector<2x32xf32> to vector<2x8xf32>
    %387 = vector.extract_strided_slice %384 {offsets = [0, 16], sizes = [2, 8], strides = [1, 1]} : vector<2x32xf32> to vector<2x8xf32>
    %388 = vector.extract_strided_slice %383 {offsets = [0, 24], sizes = [2, 8], strides = [1, 1]} : vector<2x32xf32> to vector<2x8xf32>
    %389 = arith.mulf %386, %368 : vector<2x8xf32>
    %390 = arith.mulf %385, %387 : vector<2x8xf32>
    %391 = arith.addf %389, %390 : vector<2x8xf32>
    %392 = math.tanh %391 : vector<2x8xf32>
    %393 = arith.mulf %388, %392 : vector<2x8xf32>
    %394 = math.tanh %393 : vector<2x8xf32>
    %395 = arith.index_cast %374 : i32 to index
    %c0_113 = arith.constant 0 : index
    %396 = vector.load %arg7[%395, %c0_113] : memref<16x8xf32, #tpu.memory_space<vmem>>, vector<2x8xf32>
    tpu.vector_store %arg7[%395, %c0_113], %394 {strides = array<i32>} : memref<16x8xf32, #tpu.memory_space<vmem>>, vector<2x8xf32>,
    %c7_i32_114 = arith.constant 7 : i32
    %c2_i32_115 = arith.constant 2 : i32
    %397 = arith.muli %c7_i32_114, %c2_i32_115 : i32
    %398 = arith.index_cast %397 : i32 to index
    %c0_116 = arith.constant 0 : index
    %399 = vector.load %arg10[%398, %c0_116] : memref<16x32xf32, #tpu.memory_space<vmem>>, vector<2x32xf32>
    %cst_117 = arith.constant dense<0.000000e+00> : vector<2x32xf32>
    %400 = tpu.matmul %393, %233, %cst_117 {dimension_numbers = #tpu.dot_dimension_numbers<[1], [0], [0], [1], [0, 0, 1, 1], [], []>} : vector<2x8xf32>, vector<8x32xf32>, vector<2x32xf32> -> vector<2x32xf32>
    %401 = arith.addf %399, %400 : vector<2x32xf32>
    %402 = arith.negf %401 : vector<2x32xf32>
    %403 = math.exp %402 : vector<2x32xf32>
    %cst_118 = arith.constant 1.000000e+00 : f32
    %404 = vector.broadcast %cst_118 : f32 to vector<2x32xf32>
    %405 = arith.addf %404, %403 : vector<2x32xf32>
    %406 = arith.divf %404, %405 : vector<2x32xf32>
    %407 = math.tanh %401 : vector<2x32xf32>
    %408 = vector.extract_strided_slice %406 {offsets = [0, 0], sizes = [2, 8], strides = [1, 1]} : vector<2x32xf32> to vector<2x8xf32>
    %409 = vector.extract_strided_slice %406 {offsets = [0, 8], sizes = [2, 8], strides = [1, 1]} : vector<2x32xf32> to vector<2x8xf32>
    %410 = vector.extract_strided_slice %407 {offsets = [0, 16], sizes = [2, 8], strides = [1, 1]} : vector<2x32xf32> to vector<2x8xf32>
    %411 = vector.extract_strided_slice %406 {offsets = [0, 24], sizes = [2, 8], strides = [1, 1]} : vector<2x32xf32> to vector<2x8xf32>
    %412 = arith.mulf %409, %391 : vector<2x8xf32>
    %413 = arith.mulf %408, %410 : vector<2x8xf32>
    %414 = arith.addf %412, %413 : vector<2x8xf32>
    %415 = math.tanh %414 : vector<2x8xf32>
    %416 = arith.mulf %411, %415 : vector<2x8xf32>
    %417 = math.tanh %416 : vector<2x8xf32>
    %418 = arith.index_cast %397 : i32 to index
    %c0_119 = arith.constant 0 : index
    %419 = vector.load %arg7[%418, %c0_119] : memref<16x8xf32, #tpu.memory_space<vmem>>, vector<2x8xf32>
    tpu.vector_store %arg7[%418, %c0_119], %417 {strides = array<i32>} : memref<16x8xf32, #tpu.memory_space<vmem>>, vector<2x8xf32>,
    %c8_i32_120 = arith.constant 8 : i32
    return
  }
}

</mosaic_0001>

<llo_original>
// kernel: tpu_custom_call.1
$region0: #{tpu_custom_call.1}
  #allocation0 [shape = 'u32[]', space=smem, size = 0x4, offset = 0x4, fixed_abs, tag = 'smem constant byte address 0x4 - core index']
  #allocation1 [shape = 'u32[144,128]{1,0:T(1,128)}', space=vmem, size = 0x12000, scoped, tag = 'internal scratch']
  #allocation2 [shape = 'f32[16,32]{1,0:T(8,128)}', space=vmem, size = 0x2000, scoped, tag = 'scratch operand']
  #allocation3 [shape = 'f32[16,128]{1,0:T(8,128)}', space=vmem, size = 0x2000, scoped, tag = 'scratch operand']
  #allocation4 [shape = 'f32[16,32]{1,0:T(8,128)}', space=vmem, size = 0x2000, scoped, tag = 'scratch operand']
  %s0 = inlined_call_operand.hbm [shape: f32[16,16], index: 0, kind: input, shape index: {}]
  %s1 = inlined_call_operand.hbm [shape: f32[16,128], index: 1, kind: input, shape index: {}]
  %s2 = inlined_call_operand.hbm [shape: f32[32,128], index: 2, kind: input, shape index: {}]
  %s3 = inlined_call_operand.vmem [shape: f32[1,128], index: 3, kind: input, shape index: {}]
  %s4 = inlined_call_operand.hbm [shape: f32[32,32], index: 4, kind: input, shape index: {}]
  %s5 = inlined_call_operand.vmem [shape: f32[8,32], index: 5, kind: input, shape index: {}]
  %s6 = inlined_call_operand.vmem [shape: f32[1,32], index: 6, kind: input, shape index: {}]
  %s7 = inlined_call_operand.vmem [shape: f32[16,8], index: 7, kind: output, shape index: {}]
  %s8 = sld [smem:[#allocation0]]
  $region54: #{tpu_custom_call.1} parent=0
    _
  %s10 = ssub.s32 1, %s8
  %s11 = scalar_select 0, %s10, %s8
  $region1: #{tpu_custom_call.1} parent=0
    #allocation5 [shape = 'u8[8192]{0}', space=vmem, size = 0x2000, scoped, tag = 'input window, operand 0, single buffered']
    #allocation6 [shape = 's32[1]{0}', space=sflag, size = 0x4, scoped, tag = 'scoped memory for tpu_custom_call.1']
    #allocation7 [shape = 'u8[8192]{0}', space=vmem, size = 0x2000, scoped, tag = 'input window, operand 1, single buffered']
    #allocation8 [shape = 's32[1]{0}', space=sflag, size = 0x4, scoped, tag = 'scoped memory for tpu_custom_call.1']
    #allocation9 [shape = 'u8[16384]{0}', space=vmem, size = 0x4000, scoped, tag = 'input window, operand 2, single buffered']
    #allocation10 [shape = 'u8[16384]{0}', space=vmem, size = 0x4000, scoped, tag = 'input window, operand 4, single buffered']
    #allocation11 [shape = 's32[1]{0}', space=sflag, size = 0x4, scoped, tag = 'scoped memory for tpu_custom_call.1']
    %12 = vsyncpa [#allocation6], 0
    %13 = vsyncpa [#allocation8], 0
    %14 = vsyncpa [#allocation11], 0
    // Predicated region
    $region2: #{tpu_custom_call.1} parent=1 // pred_check
      _
    $region3: #{tpu_custom_call.1} parent=1 // pred_check_branch
      %16 = sbr.rel (0) target = $region5
    $region4: #{tpu_custom_call.1} parent=1 // pred_region
      %s18 = ssub.s32 256, 256
      %19 = vsyncadd [#allocation6], %s18
      %s20 = sshll.u32 [#allocation5], 4
      %s21 = int_to_ptr.vmem [resolvable:$true] %s20
      %26 = dma.hbm_to_vmem [thread:$0]  %s0, 256, %s21, [#allocation6], 128, 128, 8
    $region5: #{tpu_custom_call.1} parent=1 // pred_fallthru
      _
    // Predicated region
    $region6: #{tpu_custom_call.1} parent=1 // pred_check
      _
    $region7: #{tpu_custom_call.1} parent=1 // pred_check_branch
      %28 = sbr.rel (0) target = $region9
    $region8: #{tpu_custom_call.1} parent=1 // pred_region
      %s30 = ssub.s32 256, 256
      %31 = vsyncadd [#allocation8], %s30
      %s32 = sshll.u32 [#allocation7], 4
      %s33 = int_to_ptr.vmem [resolvable:$true] %s32
      %38 = dma.hbm_to_vmem [thread:$0]  %s1, 256, %s33, [#allocation8], 128, 128, 8
    $region9: #{tpu_custom_call.1} parent=1 // pred_fallthru
      _
    // Predicated region
    $region10: #{tpu_custom_call.1} parent=1 // pred_check
      _
    $region11: #{tpu_custom_call.1} parent=1 // pred_check_branch
      %40 = sbr.rel (0) target = $region13
    $region12: #{tpu_custom_call.1} parent=1 // pred_region
      %s42 = ssub.s32 512, 512
      %43 = vsyncadd [#allocation8], %s42
      %s44 = sshll.u32 [#allocation9], 4
      %s45 = int_to_ptr.vmem [resolvable:$true] %s44
      %50 = dma.hbm_to_vmem [thread:$0]  %s2, 512, %s45, [#allocation8], 128, 128, 8
    $region13: #{tpu_custom_call.1} parent=1 // pred_fallthru
      _
    // Predicated region
    $region14: #{tpu_custom_call.1} parent=1 // pred_check
      _
    $region15: #{tpu_custom_call.1} parent=1 // pred_check_branch
      %52 = sbr.rel (0) target = $region17
    $region16: #{tpu_custom_call.1} parent=1 // pred_region
      _
    $region17: #{tpu_custom_call.1} parent=1 // pred_fallthru
      _
    // Predicated region
    $region18: #{tpu_custom_call.1} parent=1 // pred_check
      _
    $region19: #{tpu_custom_call.1} parent=1 // pred_check_branch
      %54 = sbr.rel (0) target = $region21
    $region20: #{tpu_custom_call.1} parent=1 // pred_region
      %s56 = ssub.s32 512, 512
      %57 = vsyncadd [#allocation11], %s56
      %s58 = sshll.u32 [#allocation10], 4
      %s59 = int_to_ptr.vmem [resolvable:$true] %s58
      %64 = dma.hbm_to_vmem [thread:$0]  %s4, 512, %s59, [#allocation11], 128, 128, 8
    $region21: #{tpu_custom_call.1} parent=1 // pred_fallthru
      _
    // Predicated region
    $region22: #{tpu_custom_call.1} parent=1 // pred_check
      _
    $region23: #{tpu_custom_call.1} parent=1 // pred_check_branch
      %66 = sbr.rel (0) target = $region25
    $region24: #{tpu_custom_call.1} parent=1 // pred_region
      _
    $region25: #{tpu_custom_call.1} parent=1 // pred_fallthru
      _
    // Predicated region
    $region26: #{tpu_custom_call.1} parent=1 // pred_check
      _
    $region27: #{tpu_custom_call.1} parent=1 // pred_check_branch
      %68 = sbr.rel (0) target = $region29
    $region28: #{tpu_custom_call.1} parent=1 // pred_region
      _
    $region29: #{tpu_custom_call.1} parent=1 // pred_fallthru
      _
    // Predicated region
    $region30: #{tpu_custom_call.1} parent=1 // pred_check
      _
    $region31: #{tpu_custom_call.1} parent=1 // pred_check_branch
      %70 = sbr.rel (0) target = $region33
    $region32: #{tpu_custom_call.1} parent=1 // pred_region
      %71 = dma.done [#allocation6], 256
    $region33: #{tpu_custom_call.1} parent=1 // pred_fallthru
      _
    // Predicated region
    $region34: #{tpu_custom_call.1} parent=1 // pred_check
      _
    $region35: #{tpu_custom_call.1} parent=1 // pred_check_branch
      %73 = sbr.rel (0) target = $region37
    $region36: #{tpu_custom_call.1} parent=1 // pred_region
      %74 = dma.done [#allocation8], 256
    $region37: #{tpu_custom_call.1} parent=1 // pred_fallthru
      _
    // Predicated region
    $region38: #{tpu_custom_call.1} parent=1 // pred_check
      _
    $region39: #{tpu_custom_call.1} parent=1 // pred_check_branch
      %76 = sbr.rel (0) target = $region41
    $region40: #{tpu_custom_call.1} parent=1 // pred_region
      %77 = dma.done [#allocation8], 512
    $region41: #{tpu_custom_call.1} parent=1 // pred_fallthru
      _
    // Predicated region
    $region42: #{tpu_custom_call.1} parent=1 // pred_check
      _
    $region43: #{tpu_custom_call.1} parent=1 // pred_check_branch
      %79 = sbr.rel (0) target = $region45
    $region44: #{tpu_custom_call.1} parent=1 // pred_region
      %80 = dma.done [#allocation11], 512
    $region45: #{tpu_custom_call.1} parent=1 // pred_fallthru
      _
    %v81 = vld [vmem:[#allocation5] sm:$0xff]
    %v82 = vld [vmem:[#allocation5 + $0x8] sm:$0xff]
    %v83 = vld [vmem:[#allocation7] sm:$0xff]
    %v84 = vld [vmem:[#allocation7 + $0x8] sm:$0xff]
    %v85 = vld [vmem:[%s3] sm:$0x1]
    %v87 = vlaneseq
    %v88 = vshrl.u32 %v87, 7
    %v89 = vsub.s32 0, %v88
    %v90 = vrot.slane %v85, %v89
    %vm92 = vcmask 130048
    %v94 = vsel %vm92, %v81, 0
    %v97 = vsel %vm92, %v82, 0
    %99 = vmatprep.subr.mxu0 0.0
    %100 = vmatpush1.msra.mxu0 0.0
    %101 = vmatprep.subr.mxu0 0.0
    %102 = vmatpush1.msra.mxu0 0.0
    %103 = vmatprep.subr.mxu0 0.0
    %104 = vmatpush1.msra.mxu0 0.0
    %105 = vmatprep.subr.mxu0 0.0
    %106 = vmatpush1.msra.mxu0 0.0
    %107 = vmatprep.subr.mxu0 0.0
    %108 = vmatpush1.msra.mxu0 0.0
    %109 = vmatprep.subr.mxu0 0.0
    %110 = vmatpush1.msra.mxu0 0.0
    %111 = vmatprep.subr.mxu0 0.0
    %112 = vmatpush1.msra.mxu0 0.0
    %113 = vmatprep.subr.mxu0 0.0
    %114 = vmatpush1.msra.mxu0 0.0
    %115 = vmatprep.subr.mxu0 0.0
    %116 = vmatpush1.msra.mxu0 0.0
    %117 = vmatprep.subr.mxu0 0.0
    %118 = vmatpush1.msra.mxu0 0.0
    %119 = vmatprep.subr.mxu0 0.0
    %120 = vmatpush1.msra.mxu0 0.0
    %121 = vmatprep.subr.mxu0 0.0
    %122 = vmatpush1.msra.mxu0 0.0
    %123 = vmatprep.subr.mxu0 0.0
    %124 = vmatpush1.msra.mxu0 0.0
    %125 = vmatprep.subr.mxu0 0.0
    %126 = vmatpush1.msra.mxu0 0.0
    %127 = vmatprep.subr.mxu0 0.0
    %128 = vmatpush1.msra.mxu0 %v84
    %129 = vmatprep.subr.mxu0 0.0
    %130 = vmatpush1.msra.mxu0 %v83
    %131 = vmatprep.subr.mxu0 0.0
    %132 = vmatpush2.msra.mxu0 0.0
    %133 = vmatprep.subr.mxu0 0.0
    %134 = vmatpush2.msra.mxu0 0.0
    %135 = vmatprep.subr.mxu0 0.0
    %136 = vmatpush2.msra.mxu0 0.0
    %137 = vmatprep.subr.mxu0 0.0
    %138 = vmatpush2.msra.mxu0 0.0
    %139 = vmatprep.subr.mxu0 0.0
    %140 = vmatpush2.msra.mxu0 0.0
    %141 = vmatprep.subr.mxu0 0.0
    %142 = vmatpush2.msra.mxu0 0.0
    %143 = vmatprep.subr.mxu0 0.0
    %144 = vmatpush2.msra.mxu0 0.0
    %145 = vmatprep.subr.mxu0 0.0
    %146 = vmatpush2.msra.mxu0 0.0
    %147 = vmatprep.subr.mxu0 0.0
    %148 = vmatpush2.msra.mxu0 0.0
    %149 = vmatprep.subr.mxu0 0.0
    %150 = vmatpush2.msra.mxu0 0.0
    %151 = vmatprep.subr.mxu0 0.0
    %152 = vmatpush2.msra.mxu0 0.0
    %153 = vmatprep.subr.mxu0 0.0
    %154 = vmatpush2.msra.mxu0 0.0
    %155 = vmatprep.subr.mxu0 0.0
    %156 = vmatpush2.msra.mxu0 0.0
    %157 = vmatprep.subr.mxu0 0.0
    %158 = vmatpush2.msra.mxu0 0.0
    %159 = vmatprep.subr.mxu0 0.0
    %160 = vmatpush2.msra.mxu0 0.0
    %161 = vmatprep.subr.mxu0 0.0
    %162 = vmatpush2.msra.mxu0 0.0
    %163 = vmatprep.mubr.f32.mxu0 0.0
    %164 = vmatmul.mubr.f32.gmra.mxu0 %v94
    %v165 = vpop.f32.mrf.mxu0
    %v166 = vadd.f32 %v90, %v165
    %v167 = vpop.f32.mrf.mxu0
    %168 = vmatprep.mubr.f32.mxu0 0.0
    %169 = vmatmul.mubr.f32.gmra.mxu0 %v97
    %v170 = vpop.f32.mrf.mxu0
    %v171 = vadd.f32 %v90, %v170
    %v172 = vpop.f32.mrf.mxu0
    %173 = vdwg.mxu0
    %174 = vst [vmem:[#allocation3] sm:$0xff] %v166
    %175 = vst [vmem:[#allocation3 + $0x8] sm:$0xff] %v171
    %v176 = vld [vmem:[#allocation9] sm:$0xff]
    %v177 = vld [vmem:[#allocation9 + $0x8] sm:$0xff]
    %v178 = vld [vmem:[#allocation9 + $0x10] sm:$0xff]
    %v179 = vld [vmem:[#allocation9 + $0x18] sm:$0xff]
    %v180 = vld [vmem:[#allocation3] sm:$0x3]
    %vm181 = vcmask 261120
    %v183 = vsel %vm181, 0.0, 0
    %185 = vmatprep.subr.mxu0 0.0
    %186 = vmatpush1.msra.mxu0 0.0
    %187 = vmatprep.subr.mxu0 0.0
    %188 = vmatpush1.msra.mxu0 0.0
    %189 = vmatprep.subr.mxu0 0.0
    %190 = vmatpush1.msra.mxu0 0.0
    %191 = vmatprep.subr.mxu0 0.0
    %192 = vmatpush1.msra.mxu0 0.0
    %193 = vmatprep.subr.mxu0 0.0
    %194 = vmatpush1.msra.mxu0 0.0
    %195 = vmatprep.subr.mxu0 0.0
    %196 = vmatpush1.msra.mxu0 0.0
    %197 = vmatprep.subr.mxu0 0.0
    %198 = vmatpush1.msra.mxu0 0.0
    %199 = vmatprep.subr.mxu0 0.0
    %200 = vmatpush1.msra.mxu0 0.0
    %201 = vmatprep.subr.mxu0 0.0
    %202 = vmatpush1.msra.mxu0 0.0
    %203 = vmatprep.subr.mxu0 0.0
    %204 = vmatpush1.msra.mxu0 0.0
    %205 = vmatprep.subr.mxu0 0.0
    %206 = vmatpush1.msra.mxu0 0.0
    %207 = vmatprep.subr.mxu0 0.0
    %208 = vmatpush1.msra.mxu0 0.0
    %209 = vmatprep.subr.mxu0 0.0
    %210 = vmatpush1.msra.mxu0 %v179
    %211 = vmatprep.subr.mxu0 0.0
    %212 = vmatpush1.msra.mxu0 %v178
    %213 = vmatprep.subr.mxu0 0.0
    %214 = vmatpush1.msra.mxu0 %v177
    %215 = vmatprep.subr.mxu0 0.0
    %216 = vmatpush1.msra.mxu0 %v176
    %217 = vmatprep.subr.mxu0 0.0
    %218 = vmatpush2.msra.mxu0 0.0
    %219 = vmatprep.subr.mxu0 0.0
    %220 = vmatpush2.msra.mxu0 0.0
    %221 = vmatprep.subr.mxu0 0.0
    %222 = vmatpush2.msra.mxu0 0.0
    %223 = vmatprep.subr.mxu0 0.0
    %224 = vmatpush2.msra.mxu0 0.0
    %225 = vmatprep.subr.mxu0 0.0
    %226 = vmatpush2.msra.mxu0 0.0
    %227 = vmatprep.subr.mxu0 0.0
    %228 = vmatpush2.msra.mxu0 0.0
    %229 = vmatprep.subr.mxu0 0.0
    %230 = vmatpush2.msra.mxu0 0.0
    %231 = vmatprep.subr.mxu0 0.0
    %232 = vmatpush2.msra.mxu0 0.0
    %233 = vmatprep.subr.mxu0 0.0
    %234 = vmatpush2.msra.mxu0 0.0
    %235 = vmatprep.subr.mxu0 0.0
    %236 = vmatpush2.msra.mxu0 0.0
    %237 = vmatprep.subr.mxu0 0.0
    %238 = vmatpush2.msra.mxu0 0.0
    %239 = vmatprep.subr.mxu0 0.0
    %240 = vmatpush2.msra.mxu0 0.0
    %241 = vmatprep.subr.mxu0 0.0
    %242 = vmatpush2.msra.mxu0 0.0
    %243 = vmatprep.subr.mxu0 0.0
    %244 = vmatpush2.msra.mxu0 0.0
    %245 = vmatprep.subr.mxu0 0.0
    %246 = vmatpush2.msra.mxu0 0.0
    %247 = vmatprep.subr.mxu0 0.0
    %248 = vmatpush2.msra.mxu0 0.0
    %249 = vmatprep.mubr.f32.mxu0 0.0
    %250 = vmatmul.mubr.f32.gmra.mxu0 %v183
    %v251 = vpop.f32.mrf.mxu0
    %v252 = vadd.f32 0.0, %v251
    %v253 = vpop.f32.mrf.mxu0
    %254 = vdwg.mxu0
    %v255 = vadd.f32 %v180, %v252
    %v256 = vxor.u32 %v255, 2147483648
    %v257 = vmul.f32 %v256, 1.442695
    %v258 = vpow.pop %v257
    %v259 = vadd.f32 %v258, 1.0
    %v260 = vrcp.pop %v259
    %v261 = vmul.f32 1.0, %v260
    %v262 = vtanh.pop %v255
    %v263 = vmul.f32 %v261, 0.0
    %265 = vrot.lane.b32.xlu0 %v262, 64
    %v266 = vpop.permute.xlu0 %265
    %v268 = vmul.f32 %v261, %v266
    %270 = vrot.lane.b32.xlu0 %v268, 32
    %v271 = vpop.permute.xlu0 %270
    %v273 = vadd.f32 %v263, %v271
    %v274 = vtanh.pop %v273
    %276 = vrot.lane.b32.xlu0 %v274, 64
    %v277 = vpop.permute.xlu0 %276
    %v279 = vmul.f32 %v261, %v277
    %v280 = vxor.u32 %v279, 2147483648
    %v281 = vmul.f32 %v280, 1.442695
    %v282 = vpow.pop %v281
    %v283 = vadd.f32 %v282, 1.0
    %v284 = vrcp.pop %v283
    %v285 = vmul.f32 1.0, %v284
    %287 = vrot.lane.b32.xlu0 %v285, 32
    %v288 = vpop.permute.xlu0 %287
    %vm290 = vcmask 254976
    %291 = vst.msk [vmem:[#allocation2] sm:$0x3] %vm290, %v288
    %v292 = vld [vmem:[#allocation3 + $0x2] sm:$0x3]
    %294 = vrot.lane.b32.xlu0 %v279, 32
    %v295 = vpop.permute.xlu0 %294
    %v296 = vsel %vm181, %v295, 0
    %298 = vmatprep.subr.mxu0 0.0
    %299 = vmatpush1.msra.mxu0 0.0
    %300 = vmatprep.subr.mxu0 0.0
    %301 = vmatpush1.msra.mxu0 0.0
    %302 = vmatprep.subr.mxu0 0.0
    %303 = vmatpush1.msra.mxu0 0.0
    %304 = vmatprep.subr.mxu0 0.0
    %305 = vmatpush1.msra.mxu0 0.0
    %306 = vmatprep.subr.mxu0 0.0
    %307 = vmatpush1.msra.mxu0 0.0
    %308 = vmatprep.subr.mxu0 0.0
    %309 = vmatpush1.msra.mxu0 0.0
    %310 = vmatprep.subr.mxu0 0.0
    %311 = vmatpush1.msra.mxu0 0.0
    %312 = vmatprep.subr.mxu0 0.0
    %313 = vmatpush1.msra.mxu0 0.0
    %314 = vmatprep.subr.mxu0 0.0
    %315 = vmatpush1.msra.mxu0 0.0
    %316 = vmatprep.subr.mxu0 0.0
    %317 = vmatpush1.msra.mxu0 0.0
    %318 = vmatprep.subr.mxu0 0.0
    %319 = vmatpush1.msra.mxu0 0.0
    %320 = vmatprep.subr.mxu0 0.0
    %321 = vmatpush1.msra.mxu0 0.0
    %322 = vmatprep.subr.mxu0 0.0
    %323 = vmatpush1.msra.mxu0 %v179
    %324 = vmatprep.subr.mxu0 0.0
    %325 = vmatpush1.msra.mxu0 %v178
    %326 = vmatprep.subr.mxu0 0.0
    %327 = vmatpush1.msra.mxu0 %v177
    %328 = vmatprep.subr.mxu0 0.0
    %329 = vmatpush1.msra.mxu0 %v176
    %330 = vmatprep.subr.mxu0 0.0
    %331 = vmatpush2.msra.mxu0 0.0
    %332 = vmatprep.subr.mxu0 0.0
    %333 = vmatpush2.msra.mxu0 0.0
    %334 = vmatprep.subr.mxu0 0.0
    %335 = vmatpush2.msra.mxu0 0.0
    %336 = vmatprep.subr.mxu0 0.0
    %337 = vmatpush2.msra.mxu0 0.0
    %338 = vmatprep.subr.mxu0 0.0
    %339 = vmatpush2.msra.mxu0 0.0
    %340 = vmatprep.subr.mxu0 0.0
    %341 = vmatpush2.msra.mxu0 0.0
    %342 = vmatprep.subr.mxu0 0.0
    %343 = vmatpush2.msra.mxu0 0.0
    %344 = vmatprep.subr.mxu0 0.0
    %345 = vmatpush2.msra.mxu0 0.0
    %346 = vmatprep.subr.mxu0 0.0
    %347 = vmatpush2.msra.mxu0 0.0
    %348 = vmatprep.subr.mxu0 0.0
    %349 = vmatpush2.msra.mxu0 0.0
    %350 = vmatprep.subr.mxu0 0.0
    %351 = vmatpush2.msra.mxu0 0.0
    %352 = vmatprep.subr.mxu0 0.0
    %353 = vmatpush2.msra.mxu0 0.0
    %354 = vmatprep.subr.mxu0 0.0
    %355 = vmatpush2.msra.mxu0 0.0
    %356 = vmatprep.subr.mxu0 0.0
    %357 = vmatpush2.msra.mxu0 0.0
    %358 = vmatprep.subr.mxu0 0.0
    %359 = vmatpush2.msra.mxu0 0.0
    %360 = vmatprep.subr.mxu0 0.0
    %361 = vmatpush2.msra.mxu0 0.0
    %362 = vmatprep.mubr.f32.mxu0 0.0
    %363 = vmatmul.mubr.f32.gmra.mxu0 %v296
    %v364 = vpop.f32.mrf.mxu0
    %v365 = vadd.f32 0.0, %v364
    %v366 = vpop.f32.mrf.mxu0
    %367 = vdwg.mxu0
    %v368 = vadd.f32 %v292, %v365
    %v369 = vxor.u32 %v368, 2147483648
    %v370 = vmul.f32 %v369, 1.442695
    %v371 = vpow.pop %v370
    %v372 = vadd.f32 %v371, 1.0
    %v373 = vrcp.pop %v372
    %v374 = vmul.f32 1.0, %v373
    %v375 = vtanh.pop %v368
    %v376 = vmul.f32 %v374, %v273
    %378 = vrot.lane.b32.xlu0 %v375, 64
    %v379 = vpop.permute.xlu0 %378
    %v381 = vmul.f32 %v374, %v379
    %383 = vrot.lane.b32.xlu0 %v381, 32
    %v384 = vpop.permute.xlu0 %383
    %v386 = vadd.f32 %v376, %v384
    %v387 = vtanh.pop %v386
    %389 = vrot.lane.b32.xlu0 %v387, 64
    %v390 = vpop.permute.xlu0 %389
    %v392 = vmul.f32 %v374, %v390
    %v393 = vxor.u32 %v392, 2147483648
    %v394 = vmul.f32 %v393, 1.442695
    %v395 = vpow.pop %v394
    %v396 = vadd.f32 %v395, 1.0
    %v397 = vrcp.pop %v396
    %v398 = vmul.f32 1.0, %v397
    %400 = vrot.lane.b32.xlu0 %v398, 32
    %v401 = vpop.permute.xlu0 %400
    %403 = vst.msk [vmem:[#allocation2 + $0x2] sm:$0x3] %vm290, %v401
    %v404 = vld [vmem:[#allocation3 + $0x4] sm:$0x3]
    %406 = vrot.lane.b32.xlu0 %v392, 32
    %v407 = vpop.permute.xlu0 %406
    %v408 = vsel %vm181, %v407, 0
    %410 = vmatprep.subr.mxu0 0.0
    %411 = vmatpush1.msra.mxu0 0.0
    %412 = vmatprep.subr.mxu0 0.0
    %413 = vmatpush1.msra.mxu0 0.0
    %414 = vmatprep.subr.mxu0 0.0
    %415 = vmatpush1.msra.mxu0 0.0
    %416 = vmatprep.subr.mxu0 0.0
    %417 = vmatpush1.msra.mxu0 0.0
    %418 = vmatprep.subr.mxu0 0.0
    %419 = vmatpush1.msra.mxu0 0.0
    %420 = vmatprep.subr.mxu0 0.0
    %421 = vmatpush1.msra.mxu0 0.0
    %422 = vmatprep.subr.mxu0 0.0
    %423 = vmatpush1.msra.mxu0 0.0
    %424 = vmatprep.subr.mxu0 0.0
    %425 = vmatpush1.msra.mxu0 0.0
    %426 = vmatprep.subr.mxu0 0.0
    %427 = vmatpush1.msra.mxu0 0.0
    %428 = vmatprep.subr.mxu0 0.0
    %429 = vmatpush1.msra.mxu0 0.0
    %430 = vmatprep.subr.mxu0 0.0
    %431 = vmatpush1.msra.mxu0 0.0
    %432 = vmatprep.subr.mxu0 0.0
    %433 = vmatpush1.msra.mxu0 0.0
    %434 = vmatprep.subr.mxu0 0.0
    %435 = vmatpush1.msra.mxu0 %v179
    %436 = vmatprep.subr.mxu0 0.0
    %437 = vmatpush1.msra.mxu0 %v178
    %438 = vmatprep.subr.mxu0 0.0
    %439 = vmatpush1.msra.mxu0 %v177
    %440 = vmatprep.subr.mxu0 0.0
    %441 = vmatpush1.msra.mxu0 %v176
    %442 = vmatprep.subr.mxu0 0.0
    %443 = vmatpush2.msra.mxu0 0.0
    %444 = vmatprep.subr.mxu0 0.0
    %445 = vmatpush2.msra.mxu0 0.0
    %446 = vmatprep.subr.mxu0 0.0
    %447 = vmatpush2.msra.mxu0 0.0
    %448 = vmatprep.subr.mxu0 0.0
    %449 = vmatpush2.msra.mxu0 0.0
    %450 = vmatprep.subr.mxu0 0.0
    %451 = vmatpush2.msra.mxu0 0.0
    %452 = vmatprep.subr.mxu0 0.0
    %453 = vmatpush2.msra.mxu0 0.0
    %454 = vmatprep.subr.mxu0 0.0
    %455 = vmatpush2.msra.mxu0 0.0
    %456 = vmatprep.subr.mxu0 0.0
    %457 = vmatpush2.msra.mxu0 0.0
    %458 = vmatprep.subr.mxu0 0.0
    %459 = vmatpush2.msra.mxu0 0.0
    %460 = vmatprep.subr.mxu0 0.0
    %461 = vmatpush2.msra.mxu0 0.0
    %462 = vmatprep.subr.mxu0 0.0
    %463 = vmatpush2.msra.mxu0 0.0
    %464 = vmatprep.subr.mxu0 0.0
    %465 = vmatpush2.msra.mxu0 0.0
    %466 = vmatprep.subr.mxu0 0.0
    %467 = vmatpush2.msra.mxu0 0.0
    %468 = vmatprep.subr.mxu0 0.0
    %469 = vmatpush2.msra.mxu0 0.0
    %470 = vmatprep.subr.mxu0 0.0
    %471 = vmatpush2.msra.mxu0 0.0
    %472 = vmatprep.subr.mxu0 0.0
    %473 = vmatpush2.msra.mxu0 0.0
    %474 = vmatprep.mubr.f32.mxu0 0.0
    %475 = vmatmul.mubr.f32.gmra.mxu0 %v408
    %v476 = vpop.f32.mrf.mxu0
    %v477 = vadd.f32 0.0, %v476
    %v478 = vpop.f32.mrf.mxu0
    %479 = vdwg.mxu0
    %v480 = vadd.f32 %v404, %v477
    %v481 = vxor.u32 %v480, 2147483648
    %v482 = vmul.f32 %v481, 1.442695
    %v483 = vpow.pop %v482
    %v484 = vadd.f32 %v483, 1.0
    %v485 = vrcp.pop %v484
    %v486 = vmul.f32 1.0, %v485
    %v487 = vtanh.pop %v480
    %v488 = vmul.f32 %v486, %v386
    %490 = vrot.lane.b32.xlu0 %v487, 64
    %v491 = vpop.permute.xlu0 %490
    %v493 = vmul.f32 %v486, %v491
    %495 = vrot.lane.b32.xlu0 %v493, 32
    %v496 = vpop.permute.xlu0 %495
    %v498 = vadd.f32 %v488, %v496
    %v499 = vtanh.pop %v498
    %501 = vrot.lane.b32.xlu0 %v499, 64
    %v502 = vpop.permute.xlu0 %501
    %v504 = vmul.f32 %v486, %v502
    %v505 = vxor.u32 %v504, 2147483648
    %v506 = vmul.f32 %v505, 1.442695
    %v507 = vpow.pop %v506
    %v508 = vadd.f32 %v507, 1.0
    %v509 = vrcp.pop %v508
    %v510 = vmul.f32 1.0, %v509
    %512 = vrot.lane.b32.xlu0 %v510, 32
    %v513 = vpop.permute.xlu0 %512
    %515 = vst.msk [vmem:[#allocation2 + $0x4] sm:$0x3] %vm290, %v513
    %v516 = vld [vmem:[#allocation3 + $0x6] sm:$0x3]
    %518 = vrot.lane.b32.xlu0 %v504, 32
    %v519 = vpop.permute.xlu0 %518
    %v520 = vsel %vm181, %v519, 0
    %522 = vmatprep.subr.mxu0 0.0
    %523 = vmatpush1.msra.mxu0 0.0
    %524 = vmatprep.subr.mxu0 0.0
    %525 = vmatpush1.msra.mxu0 0.0
    %526 = vmatprep.subr.mxu0 0.0
    %527 = vmatpush1.msra.mxu0 0.0
    %528 = vmatprep.subr.mxu0 0.0
    %529 = vmatpush1.msra.mxu0 0.0
    %530 = vmatprep.subr.mxu0 0.0
    %531 = vmatpush1.msra.mxu0 0.0
    %532 = vmatprep.subr.mxu0 0.0
    %533 = vmatpush1.msra.mxu0 0.0
    %534 = vmatprep.subr.mxu0 0.0
    %535 = vmatpush1.msra.mxu0 0.0
    %536 = vmatprep.subr.mxu0 0.0
    %537 = vmatpush1.msra.mxu0 0.0
    %538 = vmatprep.subr.mxu0 0.0
    %539 = vmatpush1.msra.mxu0 0.0
    %540 = vmatprep.subr.mxu0 0.0
    %541 = vmatpush1.msra.mxu0 0.0
    %542 = vmatprep.subr.mxu0 0.0
    %543 = vmatpush1.msra.mxu0 0.0
    %544 = vmatprep.subr.mxu0 0.0
    %545 = vmatpush1.msra.mxu0 0.0
    %546 = vmatprep.subr.mxu0 0.0
    %547 = vmatpush1.msra.mxu0 %v179
    %548 = vmatprep.subr.mxu0 0.0
    %549 = vmatpush1.msra.mxu0 %v178
    %550 = vmatprep.subr.mxu0 0.0
    %551 = vmatpush1.msra.mxu0 %v177
    %552 = vmatprep.subr.mxu0 0.0
    %553 = vmatpush1.msra.mxu0 %v176
    %554 = vmatprep.subr.mxu0 0.0
    %555 = vmatpush2.msra.mxu0 0.0
    %556 = vmatprep.subr.mxu0 0.0
    %557 = vmatpush2.msra.mxu0 0.0
    %558 = vmatprep.subr.mxu0 0.0
    %559 = vmatpush2.msra.mxu0 0.0
    %560 = vmatprep.subr.mxu0 0.0
    %561 = vmatpush2.msra.mxu0 0.0
    %562 = vmatprep.subr.mxu0 0.0
    %563 = vmatpush2.msra.mxu0 0.0
    %564 = vmatprep.subr.mxu0 0.0
    %565 = vmatpush2.msra.mxu0 0.0
    %566 = vmatprep.subr.mxu0 0.0
    %567 = vmatpush2.msra.mxu0 0.0
    %568 = vmatprep.subr.mxu0 0.0
    %569 = vmatpush2.msra.mxu0 0.0
    %570 = vmatprep.subr.mxu0 0.0
    %571 = vmatpush2.msra.mxu0 0.0
    %572 = vmatprep.subr.mxu0 0.0
    %573 = vmatpush2.msra.mxu0 0.0
    %574 = vmatprep.subr.mxu0 0.0
    %575 = vmatpush2.msra.mxu0 0.0
    %576 = vmatprep.subr.mxu0 0.0
    %577 = vmatpush2.msra.mxu0 0.0
    %578 = vmatprep.subr.mxu0 0.0
    %579 = vmatpush2.msra.mxu0 0.0
    %580 = vmatprep.subr.mxu0 0.0
    %581 = vmatpush2.msra.mxu0 0.0
    %582 = vmatprep.subr.mxu0 0.0
    %583 = vmatpush2.msra.mxu0 0.0
    %584 = vmatprep.subr.mxu0 0.0
    %585 = vmatpush2.msra.mxu0 0.0
    %586 = vmatprep.mubr.f32.mxu0 0.0
    %587 = vmatmul.mubr.f32.gmra.mxu0 %v520
    %v588 = vpop.f32.mrf.mxu0
    %v589 = vadd.f32 0.0, %v588
    %v590 = vpop.f32.mrf.mxu0
    %591 = vdwg.mxu0
    %v592 = vadd.f32 %v516, %v589
    %v593 = vxor.u32 %v592, 2147483648
    %v594 = vmul.f32 %v593, 1.442695
    %v595 = vpow.pop %v594
    %v596 = vadd.f32 %v595, 1.0
    %v597 = vrcp.pop %v596
    %v598 = vmul.f32 1.0, %v597
    %v599 = vtanh.pop %v592
    %v600 = vmul.f32 %v598, %v498
    %602 = vrot.lane.b32.xlu0 %v599, 64
    %v603 = vpop.permute.xlu0 %602
    %v605 = vmul.f32 %v598, %v603
    %607 = vrot.lane.b32.xlu0 %v605, 32
    %v608 = vpop.permute.xlu0 %607
    %v610 = vadd.f32 %v600, %v608
    %v611 = vtanh.pop %v610
    %613 = vrot.lane.b32.xlu0 %v611, 64
    %v614 = vpop.permute.xlu0 %613
    %v616 = vmul.f32 %v598, %v614
    %v617 = vxor.u32 %v616, 2147483648
    %v618 = vmul.f32 %v617, 1.442695
    %v619 = vpow.pop %v618
    %v620 = vadd.f32 %v619, 1.0
    %v621 = vrcp.pop %v620
    %v622 = vmul.f32 1.0, %v621
    %624 = vrot.lane.b32.xlu0 %v622, 32
    %v625 = vpop.permute.xlu0 %624
    %627 = vst.msk [vmem:[#allocation2 + $0x6] sm:$0x3] %vm290, %v625
    %v628 = vld [vmem:[#allocation3 + $0x8] sm:$0x3]
    %630 = vrot.lane.b32.xlu0 %v616, 32
    %v631 = vpop.permute.xlu0 %630
    %v632 = vsel %vm181, %v631, 0
    %634 = vmatprep.subr.mxu0 0.0
    %635 = vmatpush1.msra.mxu0 0.0
    %636 = vmatprep.subr.mxu0 0.0
    %637 = vmatpush1.msra.mxu0 0.0
    %638 = vmatprep.subr.mxu0 0.0
    %639 = vmatpush1.msra.mxu0 0.0
    %640 = vmatprep.subr.mxu0 0.0
    %641 = vmatpush1.msra.mxu0 0.0
    %642 = vmatprep.subr.mxu0 0.0
    %643 = vmatpush1.msra.mxu0 0.0
    %644 = vmatprep.subr.mxu0 0.0
    %645 = vmatpush1.msra.mxu0 0.0
    %646 = vmatprep.subr.mxu0 0.0
    %647 = vmatpush1.msra.mxu0 0.0
    %648 = vmatprep.subr.mxu0 0.0
    %649 = vmatpush1.msra.mxu0 0.0
    %650 = vmatprep.subr.mxu0 0.0
    %651 = vmatpush1.msra.mxu0 0.0
    %652 = vmatprep.subr.mxu0 0.0
    %653 = vmatpush1.msra.mxu0 0.0
    %654 = vmatprep.subr.mxu0 0.0
    %655 = vmatpush1.msra.mxu0 0.0
    %656 = vmatprep.subr.mxu0 0.0
    %657 = vmatpush1.msra.mxu0 0.0
    %658 = vmatprep.subr.mxu0 0.0
    %659 = vmatpush1.msra.mxu0 %v179
    %660 = vmatprep.subr.mxu0 0.0
    %661 = vmatpush1.msra.mxu0 %v178
    %662 = vmatprep.subr.mxu0 0.0
    %663 = vmatpush1.msra.mxu0 %v177
    %664 = vmatprep.subr.mxu0 0.0
    %665 = vmatpush1.msra.mxu0 %v176
    %666 = vmatprep.subr.mxu0 0.0
    %667 = vmatpush2.msra.mxu0 0.0
    %668 = vmatprep.subr.mxu0 0.0
    %669 = vmatpush2.msra.mxu0 0.0
    %670 = vmatprep.subr.mxu0 0.0
    %671 = vmatpush2.msra.mxu0 0.0
    %672 = vmatprep.subr.mxu0 0.0
    %673 = vmatpush2.msra.mxu0 0.0
    %674 = vmatprep.subr.mxu0 0.0
    %675 = vmatpush2.msra.mxu0 0.0
    %676 = vmatprep.subr.mxu0 0.0
    %677 = vmatpush2.msra.mxu0 0.0
    %678 = vmatprep.subr.mxu0 0.0
    %679 = vmatpush2.msra.mxu0 0.0
    %680 = vmatprep.subr.mxu0 0.0
    %681 = vmatpush2.msra.mxu0 0.0
    %682 = vmatprep.subr.mxu0 0.0
    %683 = vmatpush2.msra.mxu0 0.0
    %684 = vmatprep.subr.mxu0 0.0
    %685 = vmatpush2.msra.mxu0 0.0
    %686 = vmatprep.subr.mxu0 0.0
    %687 = vmatpush2.msra.mxu0 0.0
    %688 = vmatprep.subr.mxu0 0.0
    %689 = vmatpush2.msra.mxu0 0.0
    %690 = vmatprep.subr.mxu0 0.0
    %691 = vmatpush2.msra.mxu0 0.0
    %692 = vmatprep.subr.mxu0 0.0
    %693 = vmatpush2.msra.mxu0 0.0
    %694 = vmatprep.subr.mxu0 0.0
    %695 = vmatpush2.msra.mxu0 0.0
    %696 = vmatprep.subr.mxu0 0.0
    %697 = vmatpush2.msra.mxu0 0.0
    %698 = vmatprep.mubr.f32.mxu0 0.0
    %699 = vmatmul.mubr.f32.gmra.mxu0 %v632
    %v700 = vpop.f32.mrf.mxu0
    %v701 = vadd.f32 0.0, %v700
    %v702 = vpop.f32.mrf.mxu0
    %703 = vdwg.mxu0
    %v704 = vadd.f32 %v628, %v701
    %v705 = vxor.u32 %v704, 2147483648
    %v706 = vmul.f32 %v705, 1.442695
    %v707 = vpow.pop %v706
    %v708 = vadd.f32 %v707, 1.0
    %v709 = vrcp.pop %v708
    %v710 = vmul.f32 1.0, %v709
    %v711 = vtanh.pop %v704
    %v712 = vmul.f32 %v710, %v610
    %714 = vrot.lane.b32.xlu0 %v711, 64
    %v715 = vpop.permute.xlu0 %714
    %v717 = vmul.f32 %v710, %v715
    %719 = vrot.lane.b32.xlu0 %v717, 32
    %v720 = vpop.permute.xlu0 %719
    %v722 = vadd.f32 %v712, %v720
    %v723 = vtanh.pop %v722
    %725 = vrot.lane.b32.xlu0 %v723, 64
    %v726 = vpop.permute.xlu0 %725
    %v728 = vmul.f32 %v710, %v726
    %v729 = vxor.u32 %v728, 2147483648
    %v730 = vmul.f32 %v729, 1.442695
    %v731 = vpow.pop %v730
    %v732 = vadd.f32 %v731, 1.0
    %v733 = vrcp.pop %v732
    %v734 = vmul.f32 1.0, %v733
    %736 = vrot.lane.b32.xlu0 %v734, 32
    %v737 = vpop.permute.xlu0 %736
    %739 = vst.msk [vmem:[#allocation2 + $0x8] sm:$0x3] %vm290, %v737
    %v740 = vld [vmem:[#allocation3 + $0xa] sm:$0x3]
    %742 = vrot.lane.b32.xlu0 %v728, 32
    %v743 = vpop.permute.xlu0 %742
    %v744 = vsel %vm181, %v743, 0
    %746 = vmatprep.subr.mxu0 0.0
    %747 = vmatpush1.msra.mxu0 0.0
    %748 = vmatprep.subr.mxu0 0.0
    %749 = vmatpush1.msra.mxu0 0.0
    %750 = vmatprep.subr.mxu0 0.0
    %751 = vmatpush1.msra.mxu0 0.0
    %752 = vmatprep.subr.mxu0 0.0
    %753 = vmatpush1.msra.mxu0 0.0
    %754 = vmatprep.subr.mxu0 0.0
    %755 = vmatpush1.msra.mxu0 0.0
    %756 = vmatprep.subr.mxu0 0.0
    %757 = vmatpush1.msra.mxu0 0.0
    %758 = vmatprep.subr.mxu0 0.0
    %759 = vmatpush1.msra.mxu0 0.0
    %760 = vmatprep.subr.mxu0 0.0
    %761 = vmatpush1.msra.mxu0 0.0
    %762 = vmatprep.subr.mxu0 0.0
    %763 = vmatpush1.msra.mxu0 0.0
    %764 = vmatprep.subr.mxu0 0.0
    %765 = vmatpush1.msra.mxu0 0.0
    %766 = vmatprep.subr.mxu0 0.0
    %767 = vmatpush1.msra.mxu0 0.0
    %768 = vmatprep.subr.mxu0 0.0
    %769 = vmatpush1.msra.mxu0 0.0
    %770 = vmatprep.subr.mxu0 0.0
    %771 = vmatpush1.msra.mxu0 %v179
    %772 = vmatprep.subr.mxu0 0.0
    %773 = vmatpush1.msra.mxu0 %v178
    %774 = vmatprep.subr.mxu0 0.0
    %775 = vmatpush1.msra.mxu0 %v177
    %776 = vmatprep.subr.mxu0 0.0
    %777 = vmatpush1.msra.mxu0 %v176
    %778 = vmatprep.subr.mxu0 0.0
    %779 = vmatpush2.msra.mxu0 0.0
    %780 = vmatprep.subr.mxu0 0.0
    %781 = vmatpush2.msra.mxu0 0.0
    %782 = vmatprep.subr.mxu0 0.0
    %783 = vmatpush2.msra.mxu0 0.0
    %784 = vmatprep.subr.mxu0 0.0
    %785 = vmatpush2.msra.mxu0 0.0
    %786 = vmatprep.subr.mxu0 0.0
    %787 = vmatpush2.msra.mxu0 0.0
    %788 = vmatprep.subr.mxu0 0.0
    %789 = vmatpush2.msra.mxu0 0.0
    %790 = vmatprep.subr.mxu0 0.0
    %791 = vmatpush2.msra.mxu0 0.0
    %792 = vmatprep.subr.mxu0 0.0
    %793 = vmatpush2.msra.mxu0 0.0
    %794 = vmatprep.subr.mxu0 0.0
    %795 = vmatpush2.msra.mxu0 0.0
    %796 = vmatprep.subr.mxu0 0.0
    %797 = vmatpush2.msra.mxu0 0.0
    %798 = vmatprep.subr.mxu0 0.0
    %799 = vmatpush2.msra.mxu0 0.0
    %800 = vmatprep.subr.mxu0 0.0
    %801 = vmatpush2.msra.mxu0 0.0
    %802 = vmatprep.subr.mxu0 0.0
    %803 = vmatpush2.msra.mxu0 0.0
    %804 = vmatprep.subr.mxu0 0.0
    %805 = vmatpush2.msra.mxu0 0.0
    %806 = vmatprep.subr.mxu0 0.0
    %807 = vmatpush2.msra.mxu0 0.0
    %808 = vmatprep.subr.mxu0 0.0
    %809 = vmatpush2.msra.mxu0 0.0
    %810 = vmatprep.mubr.f32.mxu0 0.0
    %811 = vmatmul.mubr.f32.gmra.mxu0 %v744
    %v812 = vpop.f32.mrf.mxu0
    %v813 = vadd.f32 0.0, %v812
    %v814 = vpop.f32.mrf.mxu0
    %815 = vdwg.mxu0
    %v816 = vadd.f32 %v740, %v813
    %v817 = vxor.u32 %v816, 2147483648
    %v818 = vmul.f32 %v817, 1.442695
    %v819 = vpow.pop %v818
    %v820 = vadd.f32 %v819, 1.0
    %v821 = vrcp.pop %v820
    %v822 = vmul.f32 1.0, %v821
    %v823 = vtanh.pop %v816
    %v824 = vmul.f32 %v822, %v722
    %826 = vrot.lane.b32.xlu0 %v823, 64
    %v827 = vpop.permute.xlu0 %826
    %v829 = vmul.f32 %v822, %v827
    %831 = vrot.lane.b32.xlu0 %v829, 32
    %v832 = vpop.permute.xlu0 %831
    %v834 = vadd.f32 %v824, %v832
    %v835 = vtanh.pop %v834
    %837 = vrot.lane.b32.xlu0 %v835, 64
    %v838 = vpop.permute.xlu0 %837
    %v840 = vmul.f32 %v822, %v838
    %v841 = vxor.u32 %v840, 2147483648
    %v842 = vmul.f32 %v841, 1.442695
    %v843 = vpow.pop %v842
    %v844 = vadd.f32 %v843, 1.0
    %v845 = vrcp.pop %v844
    %v846 = vmul.f32 1.0, %v845
    %848 = vrot.lane.b32.xlu0 %v846, 32
    %v849 = vpop.permute.xlu0 %848
    %851 = vst.msk [vmem:[#allocation2 + $0xa] sm:$0x3] %vm290, %v849
    %v852 = vld [vmem:[#allocation3 + $0xc] sm:$0x3]
    %854 = vrot.lane.b32.xlu0 %v840, 32
    %v855 = vpop.permute.xlu0 %854
    %v856 = vsel %vm181, %v855, 0
    %858 = vmatprep.subr.mxu0 0.0
    %859 = vmatpush1.msra.mxu0 0.0
    %860 = vmatprep.subr.mxu0 0.0
    %861 = vmatpush1.msra.mxu0 0.0
    %862 = vmatprep.subr.mxu0 0.0
    %863 = vmatpush1.msra.mxu0 0.0
    %864 = vmatprep.subr.mxu0 0.0
    %865 = vmatpush1.msra.mxu0 0.0
    %866 = vmatprep.subr.mxu0 0.0
    %867 = vmatpush1.msra.mxu0 0.0
    %868 = vmatprep.subr.mxu0 0.0
    %869 = vmatpush1.msra.mxu0 0.0
    %870 = vmatprep.subr.mxu0 0.0
    %871 = vmatpush1.msra.mxu0 0.0
    %872 = vmatprep.subr.mxu0 0.0
    %873 = vmatpush1.msra.mxu0 0.0
    %874 = vmatprep.subr.mxu0 0.0
    %875 = vmatpush1.msra.mxu0 0.0
    %876 = vmatprep.subr.mxu0 0.0
    %877 = vmatpush1.msra.mxu0 0.0
    %878 = vmatprep.subr.mxu0 0.0
    %879 = vmatpush1.msra.mxu0 0.0
    %880 = vmatprep.subr.mxu0 0.0
    %881 = vmatpush1.msra.mxu0 0.0
    %882 = vmatprep.subr.mxu0 0.0
    %883 = vmatpush1.msra.mxu0 %v179
    %884 = vmatprep.subr.mxu0 0.0
    %885 = vmatpush1.msra.mxu0 %v178
    %886 = vmatprep.subr.mxu0 0.0
    %887 = vmatpush1.msra.mxu0 %v177
    %888 = vmatprep.subr.mxu0 0.0
    %889 = vmatpush1.msra.mxu0 %v176
    %890 = vmatprep.subr.mxu0 0.0
    %891 = vmatpush2.msra.mxu0 0.0
    %892 = vmatprep.subr.mxu0 0.0
    %893 = vmatpush2.msra.mxu0 0.0
    %894 = vmatprep.subr.mxu0 0.0
    %895 = vmatpush2.msra.mxu0 0.0
    %896 = vmatprep.subr.mxu0 0.0
    %897 = vmatpush2.msra.mxu0 0.0
    %898 = vmatprep.subr.mxu0 0.0
    %899 = vmatpush2.msra.mxu0 0.0
    %900 = vmatprep.subr.mxu0 0.0
    %901 = vmatpush2.msra.mxu0 0.0
    %902 = vmatprep.subr.mxu0 0.0
    %903 = vmatpush2.msra.mxu0 0.0
    %904 = vmatprep.subr.mxu0 0.0
    %905 = vmatpush2.msra.mxu0 0.0
    %906 = vmatprep.subr.mxu0 0.0
    %907 = vmatpush2.msra.mxu0 0.0
    %908 = vmatprep.subr.mxu0 0.0
    %909 = vmatpush2.msra.mxu0 0.0
    %910 = vmatprep.subr.mxu0 0.0
    %911 = vmatpush2.msra.mxu0 0.0
    %912 = vmatprep.subr.mxu0 0.0
    %913 = vmatpush2.msra.mxu0 0.0
    %914 = vmatprep.subr.mxu0 0.0
    %915 = vmatpush2.msra.mxu0 0.0
    %916 = vmatprep.subr.mxu0 0.0
    %917 = vmatpush2.msra.mxu0 0.0
    %918 = vmatprep.subr.mxu0 0.0
    %919 = vmatpush2.msra.mxu0 0.0
    %920 = vmatprep.subr.mxu0 0.0
    %921 = vmatpush2.msra.mxu0 0.0
    %922 = vmatprep.mubr.f32.mxu0 0.0
    %923 = vmatmul.mubr.f32.gmra.mxu0 %v856
    %v924 = vpop.f32.mrf.mxu0
    %v925 = vadd.f32 0.0, %v924
    %v926 = vpop.f32.mrf.mxu0
    %927 = vdwg.mxu0
    %v928 = vadd.f32 %v852, %v925
    %v929 = vxor.u32 %v928, 2147483648
    %v930 = vmul.f32 %v929, 1.442695
    %v931 = vpow.pop %v930
    %v932 = vadd.f32 %v931, 1.0
    %v933 = vrcp.pop %v932
    %v934 = vmul.f32 1.0, %v933
    %v935 = vtanh.pop %v928
    %v936 = vmul.f32 %v934, %v834
    %938 = vrot.lane.b32.xlu0 %v935, 64
    %v939 = vpop.permute.xlu0 %938
    %v941 = vmul.f32 %v934, %v939
    %943 = vrot.lane.b32.xlu0 %v941, 32
    %v944 = vpop.permute.xlu0 %943
    %v946 = vadd.f32 %v936, %v944
    %v947 = vtanh.pop %v946
    %949 = vrot.lane.b32.xlu0 %v947, 64
    %v950 = vpop.permute.xlu0 %949
    %v952 = vmul.f32 %v934, %v950
    %v953 = vxor.u32 %v952, 2147483648
    %v954 = vmul.f32 %v953, 1.442695
    %v955 = vpow.pop %v954
    %v956 = vadd.f32 %v955, 1.0
    %v957 = vrcp.pop %v956
    %v958 = vmul.f32 1.0, %v957
    %960 = vrot.lane.b32.xlu0 %v958, 32
    %v961 = vpop.permute.xlu0 %960
    %963 = vst.msk [vmem:[#allocation2 + $0xc] sm:$0x3] %vm290, %v961
    %v964 = vld [vmem:[#allocation3 + $0xe] sm:$0x3]
    %966 = vrot.lane.b32.xlu0 %v952, 32
    %v967 = vpop.permute.xlu0 %966
    %v968 = vsel %vm181, %v967, 0
    %970 = vmatprep.subr.mxu0 0.0
    %971 = vmatpush1.msra.mxu0 0.0
    %972 = vmatprep.subr.mxu0 0.0
    %973 = vmatpush1.msra.mxu0 0.0
    %974 = vmatprep.subr.mxu0 0.0
    %975 = vmatpush1.msra.mxu0 0.0
    %976 = vmatprep.subr.mxu0 0.0
    %977 = vmatpush1.msra.mxu0 0.0
    %978 = vmatprep.subr.mxu0 0.0
    %979 = vmatpush1.msra.mxu0 0.0
    %980 = vmatprep.subr.mxu0 0.0
    %981 = vmatpush1.msra.mxu0 0.0
    %982 = vmatprep.subr.mxu0 0.0
    %983 = vmatpush1.msra.mxu0 0.0
    %984 = vmatprep.subr.mxu0 0.0
    %985 = vmatpush1.msra.mxu0 0.0
    %986 = vmatprep.subr.mxu0 0.0
    %987 = vmatpush1.msra.mxu0 0.0
    %988 = vmatprep.subr.mxu0 0.0
    %989 = vmatpush1.msra.mxu0 0.0
    %990 = vmatprep.subr.mxu0 0.0
    %991 = vmatpush1.msra.mxu0 0.0
    %992 = vmatprep.subr.mxu0 0.0
    %993 = vmatpush1.msra.mxu0 0.0
    %994 = vmatprep.subr.mxu0 0.0
    %995 = vmatpush1.msra.mxu0 %v179
    %996 = vmatprep.subr.mxu0 0.0
    %997 = vmatpush1.msra.mxu0 %v178
    %998 = vmatprep.subr.mxu0 0.0
    %999 = vmatpush1.msra.mxu0 %v177
    %1000 = vmatprep.subr.mxu0 0.0
    %1001 = vmatpush1.msra.mxu0 %v176
    %1002 = vmatprep.subr.mxu0 0.0
    %1003 = vmatpush2.msra.mxu0 0.0
    %1004 = vmatprep.subr.mxu0 0.0
    %1005 = vmatpush2.msra.mxu0 0.0
    %1006 = vmatprep.subr.mxu0 0.0
    %1007 = vmatpush2.msra.mxu0 0.0
    %1008 = vmatprep.subr.mxu0 0.0
    %1009 = vmatpush2.msra.mxu0 0.0
    %1010 = vmatprep.subr.mxu0 0.0
    %1011 = vmatpush2.msra.mxu0 0.0
    %1012 = vmatprep.subr.mxu0 0.0
    %1013 = vmatpush2.msra.mxu0 0.0
    %1014 = vmatprep.subr.mxu0 0.0
    %1015 = vmatpush2.msra.mxu0 0.0
    %1016 = vmatprep.subr.mxu0 0.0
    %1017 = vmatpush2.msra.mxu0 0.0
    %1018 = vmatprep.subr.mxu0 0.0
    %1019 = vmatpush2.msra.mxu0 0.0
    %1020 = vmatprep.subr.mxu0 0.0
    %1021 = vmatpush2.msra.mxu0 0.0
    %1022 = vmatprep.subr.mxu0 0.0
    %1023 = vmatpush2.msra.mxu0 0.0
    %1024 = vmatprep.subr.mxu0 0.0
    %1025 = vmatpush2.msra.mxu0 0.0
    %1026 = vmatprep.subr.mxu0 0.0
    %1027 = vmatpush2.msra.mxu0 0.0
    %1028 = vmatprep.subr.mxu0 0.0
    %1029 = vmatpush2.msra.mxu0 0.0
    %1030 = vmatprep.subr.mxu0 0.0
    %1031 = vmatpush2.msra.mxu0 0.0
    %1032 = vmatprep.subr.mxu0 0.0
    %1033 = vmatpush2.msra.mxu0 0.0
    %1034 = vmatprep.mubr.f32.mxu0 0.0
    %1035 = vmatmul.mubr.f32.gmra.mxu0 %v968
    %v1036 = vpop.f32.mrf.mxu0
    %v1037 = vadd.f32 0.0, %v1036
    %v1038 = vpop.f32.mrf.mxu0
    %1039 = vdwg.mxu0
    %v1040 = vadd.f32 %v964, %v1037
    %v1041 = vxor.u32 %v1040, 2147483648
    %v1042 = vmul.f32 %v1041, 1.442695
    %v1043 = vpow.pop %v1042
    %v1044 = vadd.f32 %v1043, 1.0
    %v1045 = vrcp.pop %v1044
    %v1046 = vmul.f32 1.0, %v1045
    %v1047 = vtanh.pop %v1040
    %v1048 = vmul.f32 %v1046, %v946
    %1050 = vrot.lane.b32.xlu0 %v1047, 64
    %v1051 = vpop.permute.xlu0 %1050
    %v1053 = vmul.f32 %v1046, %v1051
    %1055 = vrot.lane.b32.xlu0 %v1053, 32
    %v1056 = vpop.permute.xlu0 %1055
    %v1058 = vadd.f32 %v1048, %v1056
    %v1059 = vtanh.pop %v1058
    %1061 = vrot.lane.b32.xlu0 %v1059, 64
    %v1062 = vpop.permute.xlu0 %1061
    %v1064 = vmul.f32 %v1046, %v1062
    %v1065 = vxor.u32 %v1064, 2147483648
    %v1066 = vmul.f32 %v1065, 1.442695
    %v1067 = vpow.pop %v1066
    %v1068 = vadd.f32 %v1067, 1.0
    %v1069 = vrcp.pop %v1068
    %v1070 = vmul.f32 1.0, %v1069
    %1072 = vrot.lane.b32.xlu0 %v1070, 32
    %v1073 = vpop.permute.xlu0 %1072
    %1075 = vst.msk [vmem:[#allocation2 + $0xe] sm:$0x3] %vm290, %v1073
    %v1076 = vld [vmem:[#allocation2] sm:$0xff]
    %v1077 = vld [vmem:[#allocation2 + $0x8] sm:$0xff]
    %v1078 = vld [vmem:[#allocation10] sm:$0xff]
    %v1079 = vld [vmem:[#allocation10 + $0x8] sm:$0xff]
    %v1080 = vld [vmem:[#allocation10 + $0x10] sm:$0xff]
    %v1081 = vld [vmem:[#allocation10 + $0x18] sm:$0xff]
    %v1082 = vld [vmem:[%s6] sm:$0x1]
    %v1084 = vlaneseq
    %v1085 = vshrl.u32 %v1084, 7
    %v1086 = vsub.s32 0, %v1085
    %v1087 = vrot.slane %v1082, %v1086
    %v1090 = vsel %vm181, %v1076, 0
    %v1093 = vsel %vm181, %v1077, 0
    %1095 = vmatprep.subr.mxu0 0.0
    %1096 = vmatpush1.msra.mxu0 0.0
    %1097 = vmatprep.subr.mxu0 0.0
    %1098 = vmatpush1.msra.mxu0 0.0
    %1099 = vmatprep.subr.mxu0 0.0
    %1100 = vmatpush1.msra.mxu0 0.0
    %1101 = vmatprep.subr.mxu0 0.0
    %1102 = vmatpush1.msra.mxu0 0.0
    %1103 = vmatprep.subr.mxu0 0.0
    %1104 = vmatpush1.msra.mxu0 0.0
    %1105 = vmatprep.subr.mxu0 0.0
    %1106 = vmatpush1.msra.mxu0 0.0
    %1107 = vmatprep.subr.mxu0 0.0
    %1108 = vmatpush1.msra.mxu0 0.0
    %1109 = vmatprep.subr.mxu0 0.0
    %1110 = vmatpush1.msra.mxu0 0.0
    %1111 = vmatprep.subr.mxu0 0.0
    %1112 = vmatpush1.msra.mxu0 0.0
    %1113 = vmatprep.subr.mxu0 0.0
    %1114 = vmatpush1.msra.mxu0 0.0
    %1115 = vmatprep.subr.mxu0 0.0
    %1116 = vmatpush1.msra.mxu0 0.0
    %1117 = vmatprep.subr.mxu0 0.0
    %1118 = vmatpush1.msra.mxu0 0.0
    %1119 = vmatprep.subr.mxu0 0.0
    %1120 = vmatpush1.msra.mxu0 %v1081
    %1121 = vmatprep.subr.mxu0 0.0
    %1122 = vmatpush1.msra.mxu0 %v1080
    %1123 = vmatprep.subr.mxu0 0.0
    %1124 = vmatpush1.msra.mxu0 %v1079
    %1125 = vmatprep.subr.mxu0 0.0
    %1126 = vmatpush1.msra.mxu0 %v1078
    %1127 = vmatprep.subr.mxu0 0.0
    %1128 = vmatpush2.msra.mxu0 0.0
    %1129 = vmatprep.subr.mxu0 0.0
    %1130 = vmatpush2.msra.mxu0 0.0
    %1131 = vmatprep.subr.mxu0 0.0
    %1132 = vmatpush2.msra.mxu0 0.0
    %1133 = vmatprep.subr.mxu0 0.0
    %1134 = vmatpush2.msra.mxu0 0.0
    %1135 = vmatprep.subr.mxu0 0.0
    %1136 = vmatpush2.msra.mxu0 0.0
    %1137 = vmatprep.subr.mxu0 0.0
    %1138 = vmatpush2.msra.mxu0 0.0
    %1139 = vmatprep.subr.mxu0 0.0
    %1140 = vmatpush2.msra.mxu0 0.0
    %1141 = vmatprep.subr.mxu0 0.0
    %1142 = vmatpush2.msra.mxu0 0.0
    %1143 = vmatprep.subr.mxu0 0.0
    %1144 = vmatpush2.msra.mxu0 0.0
    %1145 = vmatprep.subr.mxu0 0.0
    %1146 = vmatpush2.msra.mxu0 0.0
    %1147 = vmatprep.subr.mxu0 0.0
    %1148 = vmatpush2.msra.mxu0 0.0
    %1149 = vmatprep.subr.mxu0 0.0
    %1150 = vmatpush2.msra.mxu0 0.0
    %1151 = vmatprep.subr.mxu0 0.0
    %1152 = vmatpush2.msra.mxu0 0.0
    %1153 = vmatprep.subr.mxu0 0.0
    %1154 = vmatpush2.msra.mxu0 0.0
    %1155 = vmatprep.subr.mxu0 0.0
    %1156 = vmatpush2.msra.mxu0 0.0
    %1157 = vmatprep.subr.mxu0 0.0
    %1158 = vmatpush2.msra.mxu0 0.0
    %1159 = vmatprep.mubr.f32.mxu0 0.0
    %1160 = vmatmul.mubr.f32.gmra.mxu0 %v1090
    %v1161 = vpop.f32.mrf.mxu0
    %v1162 = vadd.f32 %v1087, %v1161
    %v1163 = vpop.f32.mrf.mxu0
    %1164 = vmatprep.mubr.f32.mxu0 0.0
    %1165 = vmatmul.mubr.f32.gmra.mxu0 %v1093
    %v1166 = vpop.f32.mrf.mxu0
    %v1167 = vadd.f32 %v1087, %v1166
    %v1168 = vpop.f32.mrf.mxu0
    %1169 = vdwg.mxu0
    %1170 = vst.msk [vmem:[#allocation4] sm:$0xff] %vm181, %v1162
    %1171 = vst.msk [vmem:[#allocation4 + $0x8] sm:$0xff] %vm181, %v1167
    %v1172 = vld [vmem:[%s5] sm:$0xff]
    %v1173 = vld [vmem:[#allocation4] sm:$0x3]
    %vm1174 = vcmask 64512
    %v1175 = vsel %vm1174, 0.0, 0
    %1177 = vmatprep.subr.mxu0 0.0
    %1178 = vmatpush1.msra.mxu0 0.0
    %1179 = vmatprep.subr.mxu0 0.0
    %1180 = vmatpush1.msra.mxu0 0.0
    %1181 = vmatprep.subr.mxu0 0.0
    %1182 = vmatpush1.msra.mxu0 0.0
    %1183 = vmatprep.subr.mxu0 0.0
    %1184 = vmatpush1.msra.mxu0 0.0
    %1185 = vmatprep.subr.mxu0 0.0
    %1186 = vmatpush1.msra.mxu0 0.0
    %1187 = vmatprep.subr.mxu0 0.0
    %1188 = vmatpush1.msra.mxu0 0.0
    %1189 = vmatprep.subr.mxu0 0.0
    %1190 = vmatpush1.msra.mxu0 0.0
    %1191 = vmatprep.subr.mxu0 0.0
    %1192 = vmatpush1.msra.mxu0 0.0
    %1193 = vmatprep.subr.mxu0 0.0
    %1194 = vmatpush1.msra.mxu0 0.0
    %1195 = vmatprep.subr.mxu0 0.0
    %1196 = vmatpush1.msra.mxu0 0.0
    %1197 = vmatprep.subr.mxu0 0.0
    %1198 = vmatpush1.msra.mxu0 0.0
    %1199 = vmatprep.subr.mxu0 0.0
    %1200 = vmatpush1.msra.mxu0 0.0
    %1201 = vmatprep.subr.mxu0 0.0
    %1202 = vmatpush1.msra.mxu0 0.0
    %1203 = vmatprep.subr.mxu0 0.0
    %1204 = vmatpush1.msra.mxu0 0.0
    %1205 = vmatprep.subr.mxu0 0.0
    %1206 = vmatpush1.msra.mxu0 0.0
    %1207 = vmatprep.subr.mxu0 0.0
    %1208 = vmatpush1.msra.mxu0 %v1172
    %1209 = vmatprep.subr.mxu0 0.0
    %1210 = vmatpush2.msra.mxu0 0.0
    %1211 = vmatprep.subr.mxu0 0.0
    %1212 = vmatpush2.msra.mxu0 0.0
    %1213 = vmatprep.subr.mxu0 0.0
    %1214 = vmatpush2.msra.mxu0 0.0
    %1215 = vmatprep.subr.mxu0 0.0
    %1216 = vmatpush2.msra.mxu0 0.0
    %1217 = vmatprep.subr.mxu0 0.0
    %1218 = vmatpush2.msra.mxu0 0.0
    %1219 = vmatprep.subr.mxu0 0.0
    %1220 = vmatpush2.msra.mxu0 0.0
    %1221 = vmatprep.subr.mxu0 0.0
    %1222 = vmatpush2.msra.mxu0 0.0
    %1223 = vmatprep.subr.mxu0 0.0
    %1224 = vmatpush2.msra.mxu0 0.0
    %1225 = vmatprep.subr.mxu0 0.0
    %1226 = vmatpush2.msra.mxu0 0.0
    %1227 = vmatprep.subr.mxu0 0.0
    %1228 = vmatpush2.msra.mxu0 0.0
    %1229 = vmatprep.subr.mxu0 0.0
    %1230 = vmatpush2.msra.mxu0 0.0
    %1231 = vmatprep.subr.mxu0 0.0
    %1232 = vmatpush2.msra.mxu0 0.0
    %1233 = vmatprep.subr.mxu0 0.0
    %1234 = vmatpush2.msra.mxu0 0.0
    %1235 = vmatprep.subr.mxu0 0.0
    %1236 = vmatpush2.msra.mxu0 0.0
    %1237 = vmatprep.subr.mxu0 0.0
    %1238 = vmatpush2.msra.mxu0 0.0
    %1239 = vmatprep.subr.mxu0 0.0
    %1240 = vmatpush2.msra.mxu0 0.0
    %1241 = vmatprep.mubr.f32.mxu0 0.0
    %1242 = vmatmul.mubr.f32.gmra.mxu0 %v1175
    %v1243 = vpop.f32.mrf.mxu0
    %v1244 = vadd.f32 0.0, %v1243
    %v1245 = vpop.f32.mrf.mxu0
    %1246 = vdwg.mxu0
    %v1247 = vadd.f32 %v1173, %v1244
    %v1248 = vxor.u32 %v1247, 2147483648
    %v1249 = vmul.f32 %v1248, 1.442695
    %v1250 = vpow.pop %v1249
    %v1251 = vadd.f32 %v1250, 1.0
    %v1252 = vrcp.pop %v1251
    %v1253 = vmul.f32 1.0, %v1252
    %v1254 = vtanh.pop %v1247
    %v1255 = vmul.f32 %v1253, 0.0
    %1257 = vrot.lane.b32.xlu0 %v1254, 112
    %v1258 = vpop.permute.xlu0 %1257
    %v1260 = vmul.f32 %v1253, %v1258
    %1262 = vrot.lane.b32.xlu0 %v1260, 8
    %v1263 = vpop.permute.xlu0 %1262
    %v1265 = vadd.f32 %v1255, %v1263
    %v1266 = vtanh.pop %v1265
    %1268 = vrot.lane.b32.xlu0 %v1266, 16
    %v1269 = vpop.permute.xlu0 %1268
    %v1271 = vmul.f32 %v1253, %v1269
    %v1272 = vtanh.pop %v1271
    %1274 = vrot.lane.b32.xlu0 %v1272, 104
    %v1275 = vpop.permute.xlu0 %1274
    %vm1277 = vcmask 58368
    %1278 = vst.msk [vmem:[%s7] sm:$0x3] %vm1277, %v1275
    %v1279 = vld [vmem:[#allocation4 + $0x2] sm:$0x3]
    %1281 = vrot.lane.b32.xlu0 %v1271, 104
    %v1282 = vpop.permute.xlu0 %1281
    %v1283 = vsel %vm1174, %v1282, 0
    %1285 = vmatprep.subr.mxu0 0.0
    %1286 = vmatpush1.msra.mxu0 0.0
    %1287 = vmatprep.subr.mxu0 0.0
    %1288 = vmatpush1.msra.mxu0 0.0
    %1289 = vmatprep.subr.mxu0 0.0
    %1290 = vmatpush1.msra.mxu0 0.0
    %1291 = vmatprep.subr.mxu0 0.0
    %1292 = vmatpush1.msra.mxu0 0.0
    %1293 = vmatprep.subr.mxu0 0.0
    %1294 = vmatpush1.msra.mxu0 0.0
    %1295 = vmatprep.subr.mxu0 0.0
    %1296 = vmatpush1.msra.mxu0 0.0
    %1297 = vmatprep.subr.mxu0 0.0
    %1298 = vmatpush1.msra.mxu0 0.0
    %1299 = vmatprep.subr.mxu0 0.0
    %1300 = vmatpush1.msra.mxu0 0.0
    %1301 = vmatprep.subr.mxu0 0.0
    %1302 = vmatpush1.msra.mxu0 0.0
    %1303 = vmatprep.subr.mxu0 0.0
    %1304 = vmatpush1.msra.mxu0 0.0
    %1305 = vmatprep.subr.mxu0 0.0
    %1306 = vmatpush1.msra.mxu0 0.0
    %1307 = vmatprep.subr.mxu0 0.0
    %1308 = vmatpush1.msra.mxu0 0.0
    %1309 = vmatprep.subr.mxu0 0.0
    %1310 = vmatpush1.msra.mxu0 0.0
    %1311 = vmatprep.subr.mxu0 0.0
    %1312 = vmatpush1.msra.mxu0 0.0
    %1313 = vmatprep.subr.mxu0 0.0
    %1314 = vmatpush1.msra.mxu0 0.0
    %1315 = vmatprep.subr.mxu0 0.0
    %1316 = vmatpush1.msra.mxu0 %v1172
    %1317 = vmatprep.subr.mxu0 0.0
    %1318 = vmatpush2.msra.mxu0 0.0
    %1319 = vmatprep.subr.mxu0 0.0
    %1320 = vmatpush2.msra.mxu0 0.0
    %1321 = vmatprep.subr.mxu0 0.0
    %1322 = vmatpush2.msra.mxu0 0.0
    %1323 = vmatprep.subr.mxu0 0.0
    %1324 = vmatpush2.msra.mxu0 0.0
    %1325 = vmatprep.subr.mxu0 0.0
    %1326 = vmatpush2.msra.mxu0 0.0
    %1327 = vmatprep.subr.mxu0 0.0
    %1328 = vmatpush2.msra.mxu0 0.0
    %1329 = vmatprep.subr.mxu0 0.0
    %1330 = vmatpush2.msra.mxu0 0.0
    %1331 = vmatprep.subr.mxu0 0.0
    %1332 = vmatpush2.msra.mxu0 0.0
    %1333 = vmatprep.subr.mxu0 0.0
    %1334 = vmatpush2.msra.mxu0 0.0
    %1335 = vmatprep.subr.mxu0 0.0
    %1336 = vmatpush2.msra.mxu0 0.0
    %1337 = vmatprep.subr.mxu0 0.0
    %1338 = vmatpush2.msra.mxu0 0.0
    %1339 = vmatprep.subr.mxu0 0.0
    %1340 = vmatpush2.msra.mxu0 0.0
    %1341 = vmatprep.subr.mxu0 0.0
    %1342 = vmatpush2.msra.mxu0 0.0
    %1343 = vmatprep.subr.mxu0 0.0
    %1344 = vmatpush2.msra.mxu0 0.0
    %1345 = vmatprep.subr.mxu0 0.0
    %1346 = vmatpush2.msra.mxu0 0.0
    %1347 = vmatprep.subr.mxu0 0.0
    %1348 = vmatpush2.msra.mxu0 0.0
    %1349 = vmatprep.mubr.f32.mxu0 0.0
    %1350 = vmatmul.mubr.f32.gmra.mxu0 %v1283
    %v1351 = vpop.f32.mrf.mxu0
    %v1352 = vadd.f32 0.0, %v1351
    %v1353 = vpop.f32.mrf.mxu0
    %1354 = vdwg.mxu0
    %v1355 = vadd.f32 %v1279, %v1352
    %v1356 = vxor.u32 %v1355, 2147483648
    %v1357 = vmul.f32 %v1356, 1.442695
    %v1358 = vpow.pop %v1357
    %v1359 = vadd.f32 %v1358, 1.0
    %v1360 = vrcp.pop %v1359
    %v1361 = vmul.f32 1.0, %v1360
    %v1362 = vtanh.pop %v1355
    %v1363 = vmul.f32 %v1361, %v1265
    %1365 = vrot.lane.b32.xlu0 %v1362, 112
    %v1366 = vpop.permute.xlu0 %1365
    %v1368 = vmul.f32 %v1361, %v1366
    %1370 = vrot.lane.b32.xlu0 %v1368, 8
    %v1371 = vpop.permute.xlu0 %1370
    %v1373 = vadd.f32 %v1363, %v1371
    %v1374 = vtanh.pop %v1373
    %1376 = vrot.lane.b32.xlu0 %v1374, 16
    %v1377 = vpop.permute.xlu0 %1376
    %v1379 = vmul.f32 %v1361, %v1377
    %v1380 = vtanh.pop %v1379
    %1382 = vrot.lane.b32.xlu0 %v1380, 104
    %v1383 = vpop.permute.xlu0 %1382
    %1385 = vst.msk [vmem:[%s7 + $0x2] sm:$0x3] %vm1277, %v1383
    %v1386 = vld [vmem:[#allocation4 + $0x4] sm:$0x3]
    %1388 = vrot.lane.b32.xlu0 %v1379, 104
    %v1389 = vpop.permute.xlu0 %1388
    %v1390 = vsel %vm1174, %v1389, 0
    %1392 = vmatprep.subr.mxu0 0.0
    %1393 = vmatpush1.msra.mxu0 0.0
    %1394 = vmatprep.subr.mxu0 0.0
    %1395 = vmatpush1.msra.mxu0 0.0
    %1396 = vmatprep.subr.mxu0 0.0
    %1397 = vmatpush1.msra.mxu0 0.0
    %1398 = vmatprep.subr.mxu0 0.0
    %1399 = vmatpush1.msra.mxu0 0.0
    %1400 = vmatprep.subr.mxu0 0.0
    %1401 = vmatpush1.msra.mxu0 0.0
    %1402 = vmatprep.subr.mxu0 0.0
    %1403 = vmatpush1.msra.mxu0 0.0
    %1404 = vmatprep.subr.mxu0 0.0
    %1405 = vmatpush1.msra.mxu0 0.0
    %1406 = vmatprep.subr.mxu0 0.0
    %1407 = vmatpush1.msra.mxu0 0.0
    %1408 = vmatprep.subr.mxu0 0.0
    %1409 = vmatpush1.msra.mxu0 0.0
    %1410 = vmatprep.subr.mxu0 0.0
    %1411 = vmatpush1.msra.mxu0 0.0
    %1412 = vmatprep.subr.mxu0 0.0
    %1413 = vmatpush1.msra.mxu0 0.0
    %1414 = vmatprep.subr.mxu0 0.0
    %1415 = vmatpush1.msra.mxu0 0.0
    %1416 = vmatprep.subr.mxu0 0.0
    %1417 = vmatpush1.msra.mxu0 0.0
    %1418 = vmatprep.subr.mxu0 0.0
    %1419 = vmatpush1.msra.mxu0 0.0
    %1420 = vmatprep.subr.mxu0 0.0
    %1421 = vmatpush1.msra.mxu0 0.0
    %1422 = vmatprep.subr.mxu0 0.0
    %1423 = vmatpush1.msra.mxu0 %v1172
    %1424 = vmatprep.subr.mxu0 0.0
    %1425 = vmatpush2.msra.mxu0 0.0
    %1426 = vmatprep.subr.mxu0 0.0
    %1427 = vmatpush2.msra.mxu0 0.0
    %1428 = vmatprep.subr.mxu0 0.0
    %1429 = vmatpush2.msra.mxu0 0.0
    %1430 = vmatprep.subr.mxu0 0.0
    %1431 = vmatpush2.msra.mxu0 0.0
    %1432 = vmatprep.subr.mxu0 0.0
    %1433 = vmatpush2.msra.mxu0 0.0
    %1434 = vmatprep.subr.mxu0 0.0
    %1435 = vmatpush2.msra.mxu0 0.0
    %1436 = vmatprep.subr.mxu0 0.0
    %1437 = vmatpush2.msra.mxu0 0.0
    %1438 = vmatprep.subr.mxu0 0.0
    %1439 = vmatpush2.msra.mxu0 0.0
    %1440 = vmatprep.subr.mxu0 0.0
    %1441 = vmatpush2.msra.mxu0 0.0
    %1442 = vmatprep.subr.mxu0 0.0
    %1443 = vmatpush2.msra.mxu0 0.0
    %1444 = vmatprep.subr.mxu0 0.0
    %1445 = vmatpush2.msra.mxu0 0.0
    %1446 = vmatprep.subr.mxu0 0.0
    %1447 = vmatpush2.msra.mxu0 0.0
    %1448 = vmatprep.subr.mxu0 0.0
    %1449 = vmatpush2.msra.mxu0 0.0
    %1450 = vmatprep.subr.mxu0 0.0
    %1451 = vmatpush2.msra.mxu0 0.0
    %1452 = vmatprep.subr.mxu0 0.0
    %1453 = vmatpush2.msra.mxu0 0.0
    %1454 = vmatprep.subr.mxu0 0.0
    %1455 = vmatpush2.msra.mxu0 0.0
    %1456 = vmatprep.mubr.f32.mxu0 0.0
    %1457 = vmatmul.mubr.f32.gmra.mxu0 %v1390
    %v1458 = vpop.f32.mrf.mxu0
    %v1459 = vadd.f32 0.0, %v1458
    %v1460 = vpop.f32.mrf.mxu0
    %1461 = vdwg.mxu0
    %v1462 = vadd.f32 %v1386, %v1459
    %v1463 = vxor.u32 %v1462, 2147483648
    %v1464 = vmul.f32 %v1463, 1.442695
    %v1465 = vpow.pop %v1464
    %v1466 = vadd.f32 %v1465, 1.0
    %v1467 = vrcp.pop %v1466
    %v1468 = vmul.f32 1.0, %v1467
    %v1469 = vtanh.pop %v1462
    %v1470 = vmul.f32 %v1468, %v1373
    %1472 = vrot.lane.b32.xlu0 %v1469, 112
    %v1473 = vpop.permute.xlu0 %1472
    %v1475 = vmul.f32 %v1468, %v1473
    %1477 = vrot.lane.b32.xlu0 %v1475, 8
    %v1478 = vpop.permute.xlu0 %1477
    %v1480 = vadd.f32 %v1470, %v1478
    %v1481 = vtanh.pop %v1480
    %1483 = vrot.lane.b32.xlu0 %v1481, 16
    %v1484 = vpop.permute.xlu0 %1483
    %v1486 = vmul.f32 %v1468, %v1484
    %v1487 = vtanh.pop %v1486
    %1489 = vrot.lane.b32.xlu0 %v1487, 104
    %v1490 = vpop.permute.xlu0 %1489
    %1492 = vst.msk [vmem:[%s7 + $0x4] sm:$0x3] %vm1277, %v1490
    %v1493 = vld [vmem:[#allocation4 + $0x6] sm:$0x3]
    %1495 = vrot.lane.b32.xlu0 %v1486, 104
    %v1496 = vpop.permute.xlu0 %1495
    %v1497 = vsel %vm1174, %v1496, 0
    %1499 = vmatprep.subr.mxu0 0.0
    %1500 = vmatpush1.msra.mxu0 0.0
    %1501 = vmatprep.subr.mxu0 0.0
    %1502 = vmatpush1.msra.mxu0 0.0
    %1503 = vmatprep.subr.mxu0 0.0
    %1504 = vmatpush1.msra.mxu0 0.0
    %1505 = vmatprep.subr.mxu0 0.0
    %1506 = vmatpush1.msra.mxu0 0.0
    %1507 = vmatprep.subr.mxu0 0.0
    %1508 = vmatpush1.msra.mxu0 0.0
    %1509 = vmatprep.subr.mxu0 0.0
    %1510 = vmatpush1.msra.mxu0 0.0
    %1511 = vmatprep.subr.mxu0 0.0
    %1512 = vmatpush1.msra.mxu0 0.0
    %1513 = vmatprep.subr.mxu0 0.0
    %1514 = vmatpush1.msra.mxu0 0.0
    %1515 = vmatprep.subr.mxu0 0.0
    %1516 = vmatpush1.msra.mxu0 0.0
    %1517 = vmatprep.subr.mxu0 0.0
    %1518 = vmatpush1.msra.mxu0 0.0
    %1519 = vmatprep.subr.mxu0 0.0
    %1520 = vmatpush1.msra.mxu0 0.0
    %1521 = vmatprep.subr.mxu0 0.0
    %1522 = vmatpush1.msra.mxu0 0.0
    %1523 = vmatprep.subr.mxu0 0.0
    %1524 = vmatpush1.msra.mxu0 0.0
    %1525 = vmatprep.subr.mxu0 0.0
    %1526 = vmatpush1.msra.mxu0 0.0
    %1527 = vmatprep.subr.mxu0 0.0
    %1528 = vmatpush1.msra.mxu0 0.0
    %1529 = vmatprep.subr.mxu0 0.0
    %1530 = vmatpush1.msra.mxu0 %v1172
    %1531 = vmatprep.subr.mxu0 0.0
    %1532 = vmatpush2.msra.mxu0 0.0
    %1533 = vmatprep.subr.mxu0 0.0
    %1534 = vmatpush2.msra.mxu0 0.0
    %1535 = vmatprep.subr.mxu0 0.0
    %1536 = vmatpush2.msra.mxu0 0.0
    %1537 = vmatprep.subr.mxu0 0.0
    %1538 = vmatpush2.msra.mxu0 0.0
    %1539 = vmatprep.subr.mxu0 0.0
    %1540 = vmatpush2.msra.mxu0 0.0
    %1541 = vmatprep.subr.mxu0 0.0
    %1542 = vmatpush2.msra.mxu0 0.0
    %1543 = vmatprep.subr.mxu0 0.0
    %1544 = vmatpush2.msra.mxu0 0.0
    %1545 = vmatprep.subr.mxu0 0.0
    %1546 = vmatpush2.msra.mxu0 0.0
    %1547 = vmatprep.subr.mxu0 0.0
    %1548 = vmatpush2.msra.mxu0 0.0
    %1549 = vmatprep.subr.mxu0 0.0
    %1550 = vmatpush2.msra.mxu0 0.0
    %1551 = vmatprep.subr.mxu0 0.0
    %1552 = vmatpush2.msra.mxu0 0.0
    %1553 = vmatprep.subr.mxu0 0.0
    %1554 = vmatpush2.msra.mxu0 0.0
    %1555 = vmatprep.subr.mxu0 0.0
    %1556 = vmatpush2.msra.mxu0 0.0
    %1557 = vmatprep.subr.mxu0 0.0
    %1558 = vmatpush2.msra.mxu0 0.0
    %1559 = vmatprep.subr.mxu0 0.0
    %1560 = vmatpush2.msra.mxu0 0.0
    %1561 = vmatprep.subr.mxu0 0.0
    %1562 = vmatpush2.msra.mxu0 0.0
    %1563 = vmatprep.mubr.f32.mxu0 0.0
    %1564 = vmatmul.mubr.f32.gmra.mxu0 %v1497
    %v1565 = vpop.f32.mrf.mxu0
    %v1566 = vadd.f32 0.0, %v1565
    %v1567 = vpop.f32.mrf.mxu0
    %1568 = vdwg.mxu0
    %v1569 = vadd.f32 %v1493, %v1566
    %v1570 = vxor.u32 %v1569, 2147483648
    %v1571 = vmul.f32 %v1570, 1.442695
    %v1572 = vpow.pop %v1571
    %v1573 = vadd.f32 %v1572, 1.0
    %v1574 = vrcp.pop %v1573
    %v1575 = vmul.f32 1.0, %v1574
    %v1576 = vtanh.pop %v1569
    %v1577 = vmul.f32 %v1575, %v1480
    %1579 = vrot.lane.b32.xlu0 %v1576, 112
    %v1580 = vpop.permute.xlu0 %1579
    %v1582 = vmul.f32 %v1575, %v1580
    %1584 = vrot.lane.b32.xlu0 %v1582, 8
    %v1585 = vpop.permute.xlu0 %1584
    %v1587 = vadd.f32 %v1577, %v1585
    %v1588 = vtanh.pop %v1587
    %1590 = vrot.lane.b32.xlu0 %v1588, 16
    %v1591 = vpop.permute.xlu0 %1590
    %v1593 = vmul.f32 %v1575, %v1591
    %v1594 = vtanh.pop %v1593
    %1596 = vrot.lane.b32.xlu0 %v1594, 104
    %v1597 = vpop.permute.xlu0 %1596
    %1599 = vst.msk [vmem:[%s7 + $0x6] sm:$0x3] %vm1277, %v1597
    %v1600 = vld [vmem:[#allocation4 + $0x8] sm:$0x3]
    %1602 = vrot.lane.b32.xlu0 %v1593, 104
    %v1603 = vpop.permute.xlu0 %1602
    %v1604 = vsel %vm1174, %v1603, 0
    %1606 = vmatprep.subr.mxu0 0.0
    %1607 = vmatpush1.msra.mxu0 0.0
    %1608 = vmatprep.subr.mxu0 0.0
    %1609 = vmatpush1.msra.mxu0 0.0
    %1610 = vmatprep.subr.mxu0 0.0
    %1611 = vmatpush1.msra.mxu0 0.0
    %1612 = vmatprep.subr.mxu0 0.0
    %1613 = vmatpush1.msra.mxu0 0.0
    %1614 = vmatprep.subr.mxu0 0.0
    %1615 = vmatpush1.msra.mxu0 0.0
    %1616 = vmatprep.subr.mxu0 0.0
    %1617 = vmatpush1.msra.mxu0 0.0
    %1618 = vmatprep.subr.mxu0 0.0
    %1619 = vmatpush1.msra.mxu0 0.0
    %1620 = vmatprep.subr.mxu0 0.0
    %1621 = vmatpush1.msra.mxu0 0.0
    %1622 = vmatprep.subr.mxu0 0.0
    %1623 = vmatpush1.msra.mxu0 0.0
    %1624 = vmatprep.subr.mxu0 0.0
    %1625 = vmatpush1.msra.mxu0 0.0
    %1626 = vmatprep.subr.mxu0 0.0
    %1627 = vmatpush1.msra.mxu0 0.0
    %1628 = vmatprep.subr.mxu0 0.0
    %1629 = vmatpush1.msra.mxu0 0.0
    %1630 = vmatprep.subr.mxu0 0.0
    %1631 = vmatpush1.msra.mxu0 0.0
    %1632 = vmatprep.subr.mxu0 0.0
    %1633 = vmatpush1.msra.mxu0 0.0
    %1634 = vmatprep.subr.mxu0 0.0
    %1635 = vmatpush1.msra.mxu0 0.0
    %1636 = vmatprep.subr.mxu0 0.0
    %1637 = vmatpush1.msra.mxu0 %v1172
    %1638 = vmatprep.subr.mxu0 0.0
    %1639 = vmatpush2.msra.mxu0 0.0
    %1640 = vmatprep.subr.mxu0 0.0
    %1641 = vmatpush2.msra.mxu0 0.0
    %1642 = vmatprep.subr.mxu0 0.0
    %1643 = vmatpush2.msra.mxu0 0.0
    %1644 = vmatprep.subr.mxu0 0.0
    %1645 = vmatpush2.msra.mxu0 0.0
    %1646 = vmatprep.subr.mxu0 0.0
    %1647 = vmatpush2.msra.mxu0 0.0
    %1648 = vmatprep.subr.mxu0 0.0
    %1649 = vmatpush2.msra.mxu0 0.0
    %1650 = vmatprep.subr.mxu0 0.0
    %1651 = vmatpush2.msra.mxu0 0.0
    %1652 = vmatprep.subr.mxu0 0.0
    %1653 = vmatpush2.msra.mxu0 0.0
    %1654 = vmatprep.subr.mxu0 0.0
    %1655 = vmatpush2.msra.mxu0 0.0
    %1656 = vmatprep.subr.mxu0 0.0
    %1657 = vmatpush2.msra.mxu0 0.0
    %1658 = vmatprep.subr.mxu0 0.0
    %1659 = vmatpush2.msra.mxu0 0.0
    %1660 = vmatprep.subr.mxu0 0.0
    %1661 = vmatpush2.msra.mxu0 0.0
    %1662 = vmatprep.subr.mxu0 0.0
    %1663 = vmatpush2.msra.mxu0 0.0
    %1664 = vmatprep.subr.mxu0 0.0
    %1665 = vmatpush2.msra.mxu0 0.0
    %1666 = vmatprep.subr.mxu0 0.0
    %1667 = vmatpush2.msra.mxu0 0.0
    %1668 = vmatprep.subr.mxu0 0.0
    %1669 = vmatpush2.msra.mxu0 0.0
    %1670 = vmatprep.mubr.f32.mxu0 0.0
    %1671 = vmatmul.mubr.f32.gmra.mxu0 %v1604
    %v1672 = vpop.f32.mrf.mxu0
    %v1673 = vadd.f32 0.0, %v1672
    %v1674 = vpop.f32.mrf.mxu0
    %1675 = vdwg.mxu0
    %v1676 = vadd.f32 %v1600, %v1673
    %v1677 = vxor.u32 %v1676, 2147483648
    %v1678 = vmul.f32 %v1677, 1.442695
    %v1679 = vpow.pop %v1678
    %v1680 = vadd.f32 %v1679, 1.0
    %v1681 = vrcp.pop %v1680
    %v1682 = vmul.f32 1.0, %v1681
    %v1683 = vtanh.pop %v1676
    %v1684 = vmul.f32 %v1682, %v1587
    %1686 = vrot.lane.b32.xlu0 %v1683, 112
    %v1687 = vpop.permute.xlu0 %1686
    %v1689 = vmul.f32 %v1682, %v1687
    %1691 = vrot.lane.b32.xlu0 %v1689, 8
    %v1692 = vpop.permute.xlu0 %1691
    %v1694 = vadd.f32 %v1684, %v1692
    %v1695 = vtanh.pop %v1694
    %1697 = vrot.lane.b32.xlu0 %v1695, 16
    %v1698 = vpop.permute.xlu0 %1697
    %v1700 = vmul.f32 %v1682, %v1698
    %v1701 = vtanh.pop %v1700
    %1703 = vrot.lane.b32.xlu0 %v1701, 104
    %v1704 = vpop.permute.xlu0 %1703
    %1706 = vst.msk [vmem:[%s7 + $0x8] sm:$0x3] %vm1277, %v1704
    %v1707 = vld [vmem:[#allocation4 + $0xa] sm:$0x3]
    %1709 = vrot.lane.b32.xlu0 %v1700, 104
    %v1710 = vpop.permute.xlu0 %1709
    %v1711 = vsel %vm1174, %v1710, 0
    %1713 = vmatprep.subr.mxu0 0.0
    %1714 = vmatpush1.msra.mxu0 0.0
    %1715 = vmatprep.subr.mxu0 0.0
    %1716 = vmatpush1.msra.mxu0 0.0
    %1717 = vmatprep.subr.mxu0 0.0
    %1718 = vmatpush1.msra.mxu0 0.0
    %1719 = vmatprep.subr.mxu0 0.0
    %1720 = vmatpush1.msra.mxu0 0.0
    %1721 = vmatprep.subr.mxu0 0.0
    %1722 = vmatpush1.msra.mxu0 0.0
    %1723 = vmatprep.subr.mxu0 0.0
    %1724 = vmatpush1.msra.mxu0 0.0
    %1725 = vmatprep.subr.mxu0 0.0
    %1726 = vmatpush1.msra.mxu0 0.0
    %1727 = vmatprep.subr.mxu0 0.0
    %1728 = vmatpush1.msra.mxu0 0.0
    %1729 = vmatprep.subr.mxu0 0.0
    %1730 = vmatpush1.msra.mxu0 0.0
    %1731 = vmatprep.subr.mxu0 0.0
    %1732 = vmatpush1.msra.mxu0 0.0
    %1733 = vmatprep.subr.mxu0 0.0
    %1734 = vmatpush1.msra.mxu0 0.0
    %1735 = vmatprep.subr.mxu0 0.0
    %1736 = vmatpush1.msra.mxu0 0.0
    %1737 = vmatprep.subr.mxu0 0.0
    %1738 = vmatpush1.msra.mxu0 0.0
    %1739 = vmatprep.subr.mxu0 0.0
    %1740 = vmatpush1.msra.mxu0 0.0
    %1741 = vmatprep.subr.mxu0 0.0
    %1742 = vmatpush1.msra.mxu0 0.0
    %1743 = vmatprep.subr.mxu0 0.0
    %1744 = vmatpush1.msra.mxu0 %v1172
    %1745 = vmatprep.subr.mxu0 0.0
    %1746 = vmatpush2.msra.mxu0 0.0
    %1747 = vmatprep.subr.mxu0 0.0
    %1748 = vmatpush2.msra.mxu0 0.0
    %1749 = vmatprep.subr.mxu0 0.0
    %1750 = vmatpush2.msra.mxu0 0.0
    %1751 = vmatprep.subr.mxu0 0.0
    %1752 = vmatpush2.msra.mxu0 0.0
    %1753 = vmatprep.subr.mxu0 0.0
    %1754 = vmatpush2.msra.mxu0 0.0
    %1755 = vmatprep.subr.mxu0 0.0
    %1756 = vmatpush2.msra.mxu0 0.0
    %1757 = vmatprep.subr.mxu0 0.0
    %1758 = vmatpush2.msra.mxu0 0.0
    %1759 = vmatprep.subr.mxu0 0.0
    %1760 = vmatpush2.msra.mxu0 0.0
    %1761 = vmatprep.subr.mxu0 0.0
    %1762 = vmatpush2.msra.mxu0 0.0
    %1763 = vmatprep.subr.mxu0 0.0
    %1764 = vmatpush2.msra.mxu0 0.0
    %1765 = vmatprep.subr.mxu0 0.0
    %1766 = vmatpush2.msra.mxu0 0.0
    %1767 = vmatprep.subr.mxu0 0.0
    %1768 = vmatpush2.msra.mxu0 0.0
    %1769 = vmatprep.subr.mxu0 0.0
    %1770 = vmatpush2.msra.mxu0 0.0
    %1771 = vmatprep.subr.mxu0 0.0
    %1772 = vmatpush2.msra.mxu0 0.0
    %1773 = vmatprep.subr.mxu0 0.0
    %1774 = vmatpush2.msra.mxu0 0.0
    %1775 = vmatprep.subr.mxu0 0.0
    %1776 = vmatpush2.msra.mxu0 0.0
    %1777 = vmatprep.mubr.f32.mxu0 0.0
    %1778 = vmatmul.mubr.f32.gmra.mxu0 %v1711
    %v1779 = vpop.f32.mrf.mxu0
    %v1780 = vadd.f32 0.0, %v1779
    %v1781 = vpop.f32.mrf.mxu0
    %1782 = vdwg.mxu0
    %v1783 = vadd.f32 %v1707, %v1780
    %v1784 = vxor.u32 %v1783, 2147483648
    %v1785 = vmul.f32 %v1784, 1.442695
    %v1786 = vpow.pop %v1785
    %v1787 = vadd.f32 %v1786, 1.0
    %v1788 = vrcp.pop %v1787
    %v1789 = vmul.f32 1.0, %v1788
    %v1790 = vtanh.pop %v1783
    %v1791 = vmul.f32 %v1789, %v1694
    %1793 = vrot.lane.b32.xlu0 %v1790, 112
    %v1794 = vpop.permute.xlu0 %1793
    %v1796 = vmul.f32 %v1789, %v1794
    %1798 = vrot.lane.b32.xlu0 %v1796, 8
    %v1799 = vpop.permute.xlu0 %1798
    %v1801 = vadd.f32 %v1791, %v1799
    %v1802 = vtanh.pop %v1801
    %1804 = vrot.lane.b32.xlu0 %v1802, 16
    %v1805 = vpop.permute.xlu0 %1804
    %v1807 = vmul.f32 %v1789, %v1805
    %v1808 = vtanh.pop %v1807
    %1810 = vrot.lane.b32.xlu0 %v1808, 104
    %v1811 = vpop.permute.xlu0 %1810
    %1813 = vst.msk [vmem:[%s7 + $0xa] sm:$0x3] %vm1277, %v1811
    %v1814 = vld [vmem:[#allocation4 + $0xc] sm:$0x3]
    %1816 = vrot.lane.b32.xlu0 %v1807, 104
    %v1817 = vpop.permute.xlu0 %1816
    %v1818 = vsel %vm1174, %v1817, 0
    %1820 = vmatprep.subr.mxu0 0.0
    %1821 = vmatpush1.msra.mxu0 0.0
    %1822 = vmatprep.subr.mxu0 0.0
    %1823 = vmatpush1.msra.mxu0 0.0
    %1824 = vmatprep.subr.mxu0 0.0
    %1825 = vmatpush1.msra.mxu0 0.0
    %1826 = vmatprep.subr.mxu0 0.0
    %1827 = vmatpush1.msra.mxu0 0.0
    %1828 = vmatprep.subr.mxu0 0.0
    %1829 = vmatpush1.msra.mxu0 0.0
    %1830 = vmatprep.subr.mxu0 0.0
    %1831 = vmatpush1.msra.mxu0 0.0
    %1832 = vmatprep.subr.mxu0 0.0
    %1833 = vmatpush1.msra.mxu0 0.0
    %1834 = vmatprep.subr.mxu0 0.0
    %1835 = vmatpush1.msra.mxu0 0.0
    %1836 = vmatprep.subr.mxu0 0.0
    %1837 = vmatpush1.msra.mxu0 0.0
    %1838 = vmatprep.subr.mxu0 0.0
    %1839 = vmatpush1.msra.mxu0 0.0
    %1840 = vmatprep.subr.mxu0 0.0
    %1841 = vmatpush1.msra.mxu0 0.0
    %1842 = vmatprep.subr.mxu0 0.0
    %1843 = vmatpush1.msra.mxu0 0.0
    %1844 = vmatprep.subr.mxu0 0.0
    %1845 = vmatpush1.msra.mxu0 0.0
    %1846 = vmatprep.subr.mxu0 0.0
    %1847 = vmatpush1.msra.mxu0 0.0
    %1848 = vmatprep.subr.mxu0 0.0
    %1849 = vmatpush1.msra.mxu0 0.0
    %1850 = vmatprep.subr.mxu0 0.0
    %1851 = vmatpush1.msra.mxu0 %v1172
    %1852 = vmatprep.subr.mxu0 0.0
    %1853 = vmatpush2.msra.mxu0 0.0
    %1854 = vmatprep.subr.mxu0 0.0
    %1855 = vmatpush2.msra.mxu0 0.0
    %1856 = vmatprep.subr.mxu0 0.0
    %1857 = vmatpush2.msra.mxu0 0.0
    %1858 = vmatprep.subr.mxu0 0.0
    %1859 = vmatpush2.msra.mxu0 0.0
    %1860 = vmatprep.subr.mxu0 0.0
    %1861 = vmatpush2.msra.mxu0 0.0
    %1862 = vmatprep.subr.mxu0 0.0
    %1863 = vmatpush2.msra.mxu0 0.0
    %1864 = vmatprep.subr.mxu0 0.0
    %1865 = vmatpush2.msra.mxu0 0.0
    %1866 = vmatprep.subr.mxu0 0.0
    %1867 = vmatpush2.msra.mxu0 0.0
    %1868 = vmatprep.subr.mxu0 0.0
    %1869 = vmatpush2.msra.mxu0 0.0
    %1870 = vmatprep.subr.mxu0 0.0
    %1871 = vmatpush2.msra.mxu0 0.0
    %1872 = vmatprep.subr.mxu0 0.0
    %1873 = vmatpush2.msra.mxu0 0.0
    %1874 = vmatprep.subr.mxu0 0.0
    %1875 = vmatpush2.msra.mxu0 0.0
    %1876 = vmatprep.subr.mxu0 0.0
    %1877 = vmatpush2.msra.mxu0 0.0
    %1878 = vmatprep.subr.mxu0 0.0
    %1879 = vmatpush2.msra.mxu0 0.0
    %1880 = vmatprep.subr.mxu0 0.0
    %1881 = vmatpush2.msra.mxu0 0.0
    %1882 = vmatprep.subr.mxu0 0.0
    %1883 = vmatpush2.msra.mxu0 0.0
    %1884 = vmatprep.mubr.f32.mxu0 0.0
    %1885 = vmatmul.mubr.f32.gmra.mxu0 %v1818
    %v1886 = vpop.f32.mrf.mxu0
    %v1887 = vadd.f32 0.0, %v1886
    %v1888 = vpop.f32.mrf.mxu0
    %1889 = vdwg.mxu0
    %v1890 = vadd.f32 %v1814, %v1887
    %v1891 = vxor.u32 %v1890, 2147483648
    %v1892 = vmul.f32 %v1891, 1.442695
    %v1893 = vpow.pop %v1892
    %v1894 = vadd.f32 %v1893, 1.0
    %v1895 = vrcp.pop %v1894
    %v1896 = vmul.f32 1.0, %v1895
    %v1897 = vtanh.pop %v1890
    %v1898 = vmul.f32 %v1896, %v1801
    %1900 = vrot.lane.b32.xlu0 %v1897, 112
    %v1901 = vpop.permute.xlu0 %1900
    %v1903 = vmul.f32 %v1896, %v1901
    %1905 = vrot.lane.b32.xlu0 %v1903, 8
    %v1906 = vpop.permute.xlu0 %1905
    %v1908 = vadd.f32 %v1898, %v1906
    %v1909 = vtanh.pop %v1908
    %1911 = vrot.lane.b32.xlu0 %v1909, 16
    %v1912 = vpop.permute.xlu0 %1911
    %v1914 = vmul.f32 %v1896, %v1912
    %v1915 = vtanh.pop %v1914
    %1917 = vrot.lane.b32.xlu0 %v1915, 104
    %v1918 = vpop.permute.xlu0 %1917
    %1920 = vst.msk [vmem:[%s7 + $0xc] sm:$0x3] %vm1277, %v1918
    %v1921 = vld [vmem:[#allocation4 + $0xe] sm:$0x3]
    %1923 = vrot.lane.b32.xlu0 %v1914, 104
    %v1924 = vpop.permute.xlu0 %1923
    %v1925 = vsel %vm1174, %v1924, 0
    %1927 = vmatprep.subr.mxu0 0.0
    %1928 = vmatpush1.msra.mxu0 0.0
    %1929 = vmatprep.subr.mxu0 0.0
    %1930 = vmatpush1.msra.mxu0 0.0
    %1931 = vmatprep.subr.mxu0 0.0
    %1932 = vmatpush1.msra.mxu0 0.0
    %1933 = vmatprep.subr.mxu0 0.0
    %1934 = vmatpush1.msra.mxu0 0.0
    %1935 = vmatprep.subr.mxu0 0.0
    %1936 = vmatpush1.msra.mxu0 0.0
    %1937 = vmatprep.subr.mxu0 0.0
    %1938 = vmatpush1.msra.mxu0 0.0
    %1939 = vmatprep.subr.mxu0 0.0
    %1940 = vmatpush1.msra.mxu0 0.0
    %1941 = vmatprep.subr.mxu0 0.0
    %1942 = vmatpush1.msra.mxu0 0.0
    %1943 = vmatprep.subr.mxu0 0.0
    %1944 = vmatpush1.msra.mxu0 0.0
    %1945 = vmatprep.subr.mxu0 0.0
    %1946 = vmatpush1.msra.mxu0 0.0
    %1947 = vmatprep.subr.mxu0 0.0
    %1948 = vmatpush1.msra.mxu0 0.0
    %1949 = vmatprep.subr.mxu0 0.0
    %1950 = vmatpush1.msra.mxu0 0.0
    %1951 = vmatprep.subr.mxu0 0.0
    %1952 = vmatpush1.msra.mxu0 0.0
    %1953 = vmatprep.subr.mxu0 0.0
    %1954 = vmatpush1.msra.mxu0 0.0
    %1955 = vmatprep.subr.mxu0 0.0
    %1956 = vmatpush1.msra.mxu0 0.0
    %1957 = vmatprep.subr.mxu0 0.0
    %1958 = vmatpush1.msra.mxu0 %v1172
    %1959 = vmatprep.subr.mxu0 0.0
    %1960 = vmatpush2.msra.mxu0 0.0
    %1961 = vmatprep.subr.mxu0 0.0
    %1962 = vmatpush2.msra.mxu0 0.0
    %1963 = vmatprep.subr.mxu0 0.0
    %1964 = vmatpush2.msra.mxu0 0.0
    %1965 = vmatprep.subr.mxu0 0.0
    %1966 = vmatpush2.msra.mxu0 0.0
    %1967 = vmatprep.subr.mxu0 0.0
    %1968 = vmatpush2.msra.mxu0 0.0
    %1969 = vmatprep.subr.mxu0 0.0
    %1970 = vmatpush2.msra.mxu0 0.0
    %1971 = vmatprep.subr.mxu0 0.0
    %1972 = vmatpush2.msra.mxu0 0.0
    %1973 = vmatprep.subr.mxu0 0.0
    %1974 = vmatpush2.msra.mxu0 0.0
    %1975 = vmatprep.subr.mxu0 0.0
    %1976 = vmatpush2.msra.mxu0 0.0
    %1977 = vmatprep.subr.mxu0 0.0
    %1978 = vmatpush2.msra.mxu0 0.0
    %1979 = vmatprep.subr.mxu0 0.0
    %1980 = vmatpush2.msra.mxu0 0.0
    %1981 = vmatprep.subr.mxu0 0.0
    %1982 = vmatpush2.msra.mxu0 0.0
    %1983 = vmatprep.subr.mxu0 0.0
    %1984 = vmatpush2.msra.mxu0 0.0
    %1985 = vmatprep.subr.mxu0 0.0
    %1986 = vmatpush2.msra.mxu0 0.0
    %1987 = vmatprep.subr.mxu0 0.0
    %1988 = vmatpush2.msra.mxu0 0.0
    %1989 = vmatprep.subr.mxu0 0.0
    %1990 = vmatpush2.msra.mxu0 0.0
    %1991 = vmatprep.mubr.f32.mxu0 0.0
    %1992 = vmatmul.mubr.f32.gmra.mxu0 %v1925
    %v1993 = vpop.f32.mrf.mxu0
    %v1994 = vadd.f32 0.0, %v1993
    %v1995 = vpop.f32.mrf.mxu0
    %1996 = vdwg.mxu0
    %v1997 = vadd.f32 %v1921, %v1994
    %v1998 = vxor.u32 %v1997, 2147483648
    %v1999 = vmul.f32 %v1998, 1.442695
    %v2000 = vpow.pop %v1999
    %v2001 = vadd.f32 %v2000, 1.0
    %v2002 = vrcp.pop %v2001
    %v2003 = vmul.f32 1.0, %v2002
    %v2004 = vtanh.pop %v1997
    %v2005 = vmul.f32 %v2003, %v1908
    %2007 = vrot.lane.b32.xlu0 %v2004, 112
    %v2008 = vpop.permute.xlu0 %2007
    %v2010 = vmul.f32 %v2003, %v2008
    %2012 = vrot.lane.b32.xlu0 %v2010, 8
    %v2013 = vpop.permute.xlu0 %2012
    %v2015 = vadd.f32 %v2005, %v2013
    %v2016 = vtanh.pop %v2015
    %2018 = vrot.lane.b32.xlu0 %v2016, 16
    %v2019 = vpop.permute.xlu0 %2018
    %v2021 = vmul.f32 %v2003, %v2019
    %v2022 = vtanh.pop %v2021
    %2024 = vrot.lane.b32.xlu0 %v2022, 104
    %v2025 = vpop.permute.xlu0 %2024
    %2027 = vst.msk [vmem:[%s7 + $0xe] sm:$0x3] %vm1277, %v2025
    // Predicated region
    $region46: #{tpu_custom_call.1} parent=1 // pred_check
      _
    $region47: #{tpu_custom_call.1} parent=1 // pred_check_branch
      %2029 = sbr.rel (0) target = $region49
    $region48: #{tpu_custom_call.1} parent=1 // pred_region
      _
    $region49: #{tpu_custom_call.1} parent=1 // pred_fallthru
      _
    // Predicated region
    $region50: #{tpu_custom_call.1} parent=1 // pred_check
      _
    $region51: #{tpu_custom_call.1} parent=1 // pred_check_branch
      %2031 = sbr.rel (0) target = $region53
    $region52: #{tpu_custom_call.1} parent=1 // pred_region
      _
    $region53: #{tpu_custom_call.1} parent=1 // pred_fallthru
      _
    %2032 = vsyncpa [#allocation6], 1
    %2033 = vsyncpa [#allocation8], 1
    %2034 = vsyncpa [#allocation11], 1

</llo_original>
